<compile_context>
chip_gen: v7x
topology: tpu7x:2x2x1
jax: 0.10.0
libtpu: 0.0.40
codegen_flags: <defaults>
</compile_context>

<pallas_src>
import numpy as np
import jax
import jax.numpy as jnp
from jax.experimental import pallas as pl
from jax.experimental.pallas import tpu as pltpu

D_MODEL = 64
NHEAD = 4
HEAD_DIM = D_MODEL // NHEAD
EPS = 1e-5  # nn.LayerNorm default


def encoder_layer_kernel(x_ref, wqkv_ref, bqkv_ref, wo_ref, bo_ref,
                         w1_ref, b1_ref, w2_ref, b2_ref,
                         g2_ref, beta2_ref, g1_ref, beta1_ref, out_ref):
    BB, S, D = x_ref.shape
    R = BB * S
    scale = jnp.float32(1.0 / np.sqrt(HEAD_DIM))

    x = x_ref[...].astype(jnp.float32)                     # (BB, S, D)
    xf = x.reshape(R, D)                                   # flatten batch -> rows
    x_bf = xf.astype(jnp.bfloat16)

    # ---- fused QKV projection: one (R, D) x (D, 3D) matmul ------------------
    qkv = jnp.dot(x_bf, wqkv_ref[...], preferred_element_type=jnp.float32)
    qkv = qkv + bqkv_ref[...]                              # (R, 3D), f32

    q = qkv[:, 0:D] * scale
    k = qkv[:, D:2 * D]
    v = qkv[:, 2 * D:3 * D]

    # split heads into the leading (batch) axis: (NHEAD*BB, S, HEAD_DIM)
    def to_heads(t):
        t3 = t.reshape(BB, S, D)
        return jnp.concatenate(
            [t3[:, :, h * HEAD_DIM:(h + 1) * HEAD_DIM] for h in range(NHEAD)],
            axis=0)

    qh = to_heads(q).astype(jnp.bfloat16)
    kh = to_heads(k).astype(jnp.bfloat16)
    vh = to_heads(v).astype(jnp.bfloat16)

    # ---- one batched attention over all (head, batch) pairs -----------------
    s = jnp.einsum('bqd,bkd->bqk', qh, kh,
                   preferred_element_type=jnp.float32)     # (H*BB, S, S)
    s = s - jnp.max(s, axis=-1, keepdims=True)
    p = jnp.exp(s)
    p = p * pl.reciprocal(jnp.sum(p, axis=-1, keepdims=True), approx=True)
    ctx = jnp.einsum('bqk,bkd->bqd', p.astype(jnp.bfloat16), vh,
                     preferred_element_type=jnp.float32)   # (H*BB, S, hd)

    # merge heads back into lanes, register-resident (no VMEM scratch)
    ctx = jnp.concatenate([ctx[h * BB:(h + 1) * BB] for h in range(NHEAD)],
                          axis=-1)                         # (BB, S, D)
    ctx = ctx.reshape(R, D)

    attn = jnp.dot(ctx.astype(jnp.bfloat16), wo_ref[...],
                   preferred_element_type=jnp.float32) + bo_ref[...]

    # TODO(synk): nn.Dropout(0.1) modeled as identity (inference semantics).
    src = xf + attn                                        # residual 1

    # ---- feed-forward --------------------------------------------------------
    h1 = jnp.dot(src.astype(jnp.bfloat16), w1_ref[...],
                 preferred_element_type=jnp.float32) + b1_ref[...]
    h1 = jnp.maximum(h1, 0.0)
    ff = jnp.dot(h1.astype(jnp.bfloat16), w2_ref[...],
                 preferred_element_type=jnp.float32) + b2_ref[...]
    src = src + ff                                         # residual 2

    # ---- norm2 then norm1 (exactly as written in the PyTorch forward), f32 --
    def layernorm(t, g, beta):
        mu = jnp.mean(t, axis=-1, keepdims=True)
        var = jnp.mean((t - mu) ** 2, axis=-1, keepdims=True)
        return (t - mu) * jax.lax.rsqrt(var + EPS) * g + beta

    src = layernorm(src, g2_ref[...], beta2_ref[...])
    src = layernorm(src, g1_ref[...], beta1_ref[...])

    out_ref[...] = src.reshape(BB, S, D).astype(out_ref.dtype)


def transformer_encoder_layer(src, params, *, batch_block=None):
    """src: (S, B, D) float32 (PyTorch MHA layout) -> (S, B, D) float32."""
    S, B, D = src.shape
    if batch_block is None:
        batch_block = B
    assert B % batch_block == 0

    # TODO(synk): for production shapes, accept (B, S, D) at the API boundary so
    # these two transposes (pure layout glue) disappear.
    x = jnp.transpose(src, (1, 0, 2))                      # (B, S, D)

    # fused QKV weight / bias; matmul weights cast to bf16 once, here.
    w_qkv = jnp.concatenate(
        [params['wq_t'], params['wk_t'], params['wv_t']], axis=1
    ).astype(jnp.bfloat16)                                  # (D, 3D)
    b_qkv = jnp.concatenate(
        [params['bq'], params['bk'], params['bv']], axis=1)  # (1, 3D) f32

    weights = (
        w_qkv, b_qkv,
        params['wo_t'].astype(jnp.bfloat16), params['bo'],
        params['w1_t'].astype(jnp.bfloat16), params['b1'],
        params['w2_t'].astype(jnp.bfloat16), params['b2'],
        params['g2'], params['beta2'], params['g1'], params['beta1'],
    )

    grid = (B // batch_block,)
    x_spec = pl.BlockSpec((batch_block, S, D), lambda b: (b, 0, 0))
    w_specs = [pl.BlockSpec(w.shape, lambda b: (0, 0)) for w in weights]

    out = pl.pallas_call(
        encoder_layer_kernel,
        out_shape=jax.ShapeDtypeStruct((B, S, D), src.dtype),
        grid=grid,
        in_specs=[x_spec] + w_specs,
        out_specs=pl.BlockSpec((batch_block, S, D), lambda b: (b, 0, 0)),
        compiler_params=pltpu.CompilerParams(
            dimension_semantics=("parallel",)),
    )(x, *weights)

    return jnp.transpose(out, (1, 0, 2))                   # back to (S, B, D)


# ------------------------- pure-JAX reference ---------------------------------
def reference(src, p):
    S, B, D = src.shape
    hp = jax.lax.Precision.HIGHEST

    def lin(x, w_t, b):
        return jnp.einsum('...i,io->...o', x, w_t, precision=hp) + b[0]

    q = lin(src, p['wq_t'], p['bq']).reshape(S, B, NHEAD, HEAD_DIM)
    k = lin(src, p['wk_t'], p['bk']).reshape(S, B, NHEAD, HEAD_DIM)
    v = lin(src, p['wv_t'], p['bv']).reshape(S, B, NHEAD, HEAD_DIM)
    scores = jnp.einsum('sbhd,tbhd->bhst', q, k, precision=hp) / np.sqrt(HEAD_DIM)
    attn = jax.nn.softmax(scores, axis=-1)
    ctx = jnp.einsum('bhst,tbhd->sbhd', attn, v, precision=hp).reshape(S, B, D)
    attn_out = lin(ctx, p['wo_t'], p['bo'])

    x = src + attn_out
    ff = lin(jnp.maximum(lin(x, p['w1_t'], p['b1']), 0.0), p['w2_t'], p['b2'])
    x = x + ff

    def ln(x, g, b):
        mu = jnp.mean(x, axis=-1, keepdims=True)
        var = jnp.mean((x - mu) ** 2, axis=-1, keepdims=True)
        return (x - mu) * jax.lax.rsqrt(var + EPS) * g[0] + b[0]

    x = ln(x, p['g2'], p['beta2'])
    x = ln(x, p['g1'], p['beta1'])
    return x


if __name__ == "__main__":
    S, B = 8, 2
    key = jax.random.PRNGKey(0)
    ks = jax.random.split(key, 20)

    def w(k, shape, scale=0.08):
        return jax.random.normal(k, shape, jnp.float32) * scale

    params = {
        # attention in-proj / out-proj, stored transposed (in, out)
        'wq_t': w(ks[0], (D_MODEL, D_MODEL)),
        'wk_t': w(ks[1], (D_MODEL, D_MODEL)),
        'wv_t': w(ks[2], (D_MODEL, D_MODEL)),
        'bq':   w(ks[3], (1, D_MODEL)),
        'bk':   w(ks[4], (1, D_MODEL)),
        'bv':   w(ks[5], (1, D_MODEL)),
        'wo_t': w(ks[6], (D_MODEL, D_MODEL)),
        'bo':   w(ks[7], (1, D_MODEL)),
        # feed-forward (spec uses Linear(d_model, d_model))
        'w1_t': w(ks[8], (D_MODEL, D_MODEL)),
        'b1':   w(ks[9], (1, D_MODEL)),
        'w2_t': w(ks[10], (D_MODEL, D_MODEL)),
        'b2':   w(ks[11], (1, D_MODEL)),
        # layer norms (perturbed away from default init to exercise the affine path)
        'g2':    1.0 + w(ks[13], (1, D_MODEL), 0.1),
        'beta2': w(ks[14], (1, D_MODEL), 0.1),
        'g1':    1.0 + w(ks[15], (1, D_MODEL), 0.1),
        'beta1': w(ks[16], (1, D_MODEL), 0.1),
    }

    src = jax.random.normal(ks[12], (S, B, D_MODEL), jnp.float32)

    out = jax.block_until_ready(transformer_encoder_layer(src, params))
    ref = jax.block_until_ready(reference(src, params))

    np.testing.assert_allclose(np.asarray(out), np.asarray(ref),
                               rtol=2e-2, atol=2e-2)
    print("KERNEL_OK")
</pallas_src>

<mosaic_0001>
module attributes {stable_mosaic.version = 11 : i64} {
  func.func @encoder_layer_kernel(%arg0: i32, %arg1: memref<2x8x64xf32, #tpu.memory_space<vmem>>, %arg2: memref<64x192xbf16, #tpu.memory_space<vmem>>, %arg3: memref<1x192xf32, #tpu.memory_space<vmem>>, %arg4: memref<64x64xbf16, #tpu.memory_space<vmem>>, %arg5: memref<1x64xf32, #tpu.memory_space<vmem>>, %arg6: memref<64x64xbf16, #tpu.memory_space<vmem>>, %arg7: memref<1x64xf32, #tpu.memory_space<vmem>>, %arg8: memref<64x64xbf16, #tpu.memory_space<vmem>>, %arg9: memref<1x64xf32, #tpu.memory_space<vmem>>, %arg10: memref<1x64xf32, #tpu.memory_space<vmem>>, %arg11: memref<1x64xf32, #tpu.memory_space<vmem>>, %arg12: memref<1x64xf32, #tpu.memory_space<vmem>>, %arg13: memref<1x64xf32, #tpu.memory_space<vmem>>, %arg14: memref<2x8x64xf32, #tpu.memory_space<vmem>>) attributes {dimension_semantics = [#tpu.dimension_semantics<parallel>], iteration_bounds = array<i64: 1>, scalar_prefetch = 0 : i64, scratch_operands = 0 : i64, tpu.core_type = #tpu.core_type<tc>, window_params = [{transform_indices = @transform_0, window_bounds = array<i64: 2, 8, 64>}, {pipeline_mode = #tpu.pipeline_mode<synchronous>, transform_indices = @transform_1, window_bounds = array<i64: 64, 192>}, {pipeline_mode = #tpu.pipeline_mode<synchronous>, transform_indices = @transform_2, window_bounds = array<i64: 1, 192>}, {pipeline_mode = #tpu.pipeline_mode<synchronous>, transform_indices = @transform_3, window_bounds = array<i64: 64, 64>}, {pipeline_mode = #tpu.pipeline_mode<synchronous>, transform_indices = @transform_4, window_bounds = array<i64: 1, 64>}, {pipeline_mode = #tpu.pipeline_mode<synchronous>, transform_indices = @transform_5, window_bounds = array<i64: 64, 64>}, {pipeline_mode = #tpu.pipeline_mode<synchronous>, transform_indices = @transform_6, window_bounds = array<i64: 1, 64>}, {pipeline_mode = #tpu.pipeline_mode<synchronous>, transform_indices = @transform_7, window_bounds = array<i64: 64, 64>}, {pipeline_mode = #tpu.pipeline_mode<synchronous>, transform_indices = @transform_8, window_bounds = array<i64: 1, 64>}, {pipeline_mode = #tpu.pipeline_mode<synchronous>, transform_indices = @transform_9, window_bounds = array<i64: 1, 64>}, {pipeline_mode = #tpu.pipeline_mode<synchronous>, transform_indices = @transform_10, window_bounds = array<i64: 1, 64>}, {pipeline_mode = #tpu.pipeline_mode<synchronous>, transform_indices = @transform_11, window_bounds = array<i64: 1, 64>}, {pipeline_mode = #tpu.pipeline_mode<synchronous>, transform_indices = @transform_12, window_bounds = array<i64: 1, 64>}, {transform_indices = @transform_13, window_bounds = array<i64: 2, 8, 64>}]} {
    %c0 = arith.constant 0 : index
    %c0_0 = arith.constant 0 : index
    %c0_1 = arith.constant 0 : index
    %0 = vector.load %arg1[%c0, %c0_0, %c0_1] : memref<2x8x64xf32, #tpu.memory_space<vmem>>, vector<2x8x64xf32>
    %1 = vector.shape_cast %0 : vector<2x8x64xf32> to vector<16x64xf32>
    %2 = arith.truncf %1 : vector<16x64xf32> to vector<16x64xbf16>
    %c0_2 = arith.constant 0 : index
    %c0_3 = arith.constant 0 : index
    %3 = vector.load %arg2[%c0_2, %c0_3] : memref<64x192xbf16, #tpu.memory_space<vmem>>, vector<64x192xbf16>
    %cst = arith.constant dense<0.000000e+00> : vector<16x192xf32>
    %4 = tpu.matmul %2, %3, %cst {dimension_numbers = #tpu.dot_dimension_numbers<[1], [0], [0], [1], [0, 0, 1, 1], [], []>} : vector<16x64xbf16>, vector<64x192xbf16>, vector<16x192xf32> -> vector<16x192xf32>
    %c0_4 = arith.constant 0 : index
    %c0_5 = arith.constant 0 : index
    %5 = vector.load %arg3[%c0_4, %c0_5] : memref<1x192xf32, #tpu.memory_space<vmem>>, vector<1x192xf32>
    %6 = vector.broadcast %5 : vector<1x192xf32> to vector<16x192xf32>
    %7 = arith.addf %4, %6 : vector<16x192xf32>
    %8 = vector.extract_strided_slice %7 {offsets = [0, 0], sizes = [16, 64], strides = [1, 1]} : vector<16x192xf32> to vector<16x64xf32>
    %cst_6 = arith.constant 2.500000e-01 : f32
    %9 = vector.broadcast %cst_6 : f32 to vector<16x64xf32>
    %10 = arith.mulf %8, %9 : vector<16x64xf32>
    %11 = vector.extract_strided_slice %7 {offsets = [0, 64], sizes = [16, 64], strides = [1, 1]} : vector<16x192xf32> to vector<16x64xf32>
    %12 = vector.extract_strided_slice %7 {offsets = [0, 128], sizes = [16, 64], strides = [1, 1]} : vector<16x192xf32> to vector<16x64xf32>
    %13 = vector.shape_cast %10 : vector<16x64xf32> to vector<2x8x64xf32>
    %14 = vector.extract_strided_slice %13 {offsets = [0, 0, 0], sizes = [2, 8, 16], strides = [1, 1, 1]} : vector<2x8x64xf32> to vector<2x8x16xf32>
    %15 = vector.extract_strided_slice %13 {offsets = [0, 0, 16], sizes = [2, 8, 16], strides = [1, 1, 1]} : vector<2x8x64xf32> to vector<2x8x16xf32>
    %16 = vector.extract_strided_slice %13 {offsets = [0, 0, 32], sizes = [2, 8, 16], strides = [1, 1, 1]} : vector<2x8x64xf32> to vector<2x8x16xf32>
    %17 = vector.extract_strided_slice %13 {offsets = [0, 0, 48], sizes = [2, 8, 16], strides = [1, 1, 1]} : vector<2x8x64xf32> to vector<2x8x16xf32>
    %18 = tpu.concatenate %14, %15, %16, %17 in 0 : vector<2x8x16xf32>, vector<2x8x16xf32>, vector<2x8x16xf32>, vector<2x8x16xf32> -> vector<8x8x16xf32>
    %19 = arith.truncf %18 : vector<8x8x16xf32> to vector<8x8x16xbf16>
    %20 = vector.shape_cast %11 : vector<16x64xf32> to vector<2x8x64xf32>
    %21 = vector.extract_strided_slice %20 {offsets = [0, 0, 0], sizes = [2, 8, 16], strides = [1, 1, 1]} : vector<2x8x64xf32> to vector<2x8x16xf32>
    %22 = vector.extract_strided_slice %20 {offsets = [0, 0, 16], sizes = [2, 8, 16], strides = [1, 1, 1]} : vector<2x8x64xf32> to vector<2x8x16xf32>
    %23 = vector.extract_strided_slice %20 {offsets = [0, 0, 32], sizes = [2, 8, 16], strides = [1, 1, 1]} : vector<2x8x64xf32> to vector<2x8x16xf32>
    %24 = vector.extract_strided_slice %20 {offsets = [0, 0, 48], sizes = [2, 8, 16], strides = [1, 1, 1]} : vector<2x8x64xf32> to vector<2x8x16xf32>
    %25 = tpu.concatenate %21, %22, %23, %24 in 0 : vector<2x8x16xf32>, vector<2x8x16xf32>, vector<2x8x16xf32>, vector<2x8x16xf32> -> vector<8x8x16xf32>
    %26 = arith.truncf %25 : vector<8x8x16xf32> to vector<8x8x16xbf16>
    %27 = vector.shape_cast %12 : vector<16x64xf32> to vector<2x8x64xf32>
    %28 = vector.extract_strided_slice %27 {offsets = [0, 0, 0], sizes = [2, 8, 16], strides = [1, 1, 1]} : vector<2x8x64xf32> to vector<2x8x16xf32>
    %29 = vector.extract_strided_slice %27 {offsets = [0, 0, 16], sizes = [2, 8, 16], strides = [1, 1, 1]} : vector<2x8x64xf32> to vector<2x8x16xf32>
    %30 = vector.extract_strided_slice %27 {offsets = [0, 0, 32], sizes = [2, 8, 16], strides = [1, 1, 1]} : vector<2x8x64xf32> to vector<2x8x16xf32>
    %31 = vector.extract_strided_slice %27 {offsets = [0, 0, 48], sizes = [2, 8, 16], strides = [1, 1, 1]} : vector<2x8x64xf32> to vector<2x8x16xf32>
    %32 = tpu.concatenate %28, %29, %30, %31 in 0 : vector<2x8x16xf32>, vector<2x8x16xf32>, vector<2x8x16xf32>, vector<2x8x16xf32> -> vector<8x8x16xf32>
    %33 = arith.truncf %32 : vector<8x8x16xf32> to vector<8x8x16xbf16>
    "tpu.trace_start"() <{level = 10 : i32, message = "bqd,bkd->bqk"}> : () -> ()
    %cst_7 = arith.constant dense<0.000000e+00> : vector<8x8x8xf32>
    %34 = tpu.matmul %19, %26, %cst_7 {dimension_numbers = #tpu.dot_dimension_numbers<[2], [2], [1], [1], [0, 0, 0, 1, 1, 1], [0], [0]>} : vector<8x8x16xbf16>, vector<8x8x16xbf16>, vector<8x8x8xf32> -> vector<8x8x8xf32>
    "tpu.trace_stop"() : () -> ()
    %cst_8 = arith.constant dense<0xFF800000> : vector<8x8xf32>
    %35 = vector.multi_reduction <maximumf>, %34, %cst_8 [2] : vector<8x8x8xf32> to vector<8x8xf32>
    %36 = vector.shape_cast %35 : vector<8x8xf32> to vector<8x8x1xf32>
    %37 = vector.broadcast %36 : vector<8x8x1xf32> to vector<8x8x8xf32>
    %38 = arith.subf %34, %37 : vector<8x8x8xf32>
    %39 = math.exp %38 : vector<8x8x8xf32>
    %cst_9 = arith.constant dense<0.000000e+00> : vector<8x8xf32>
    %40 = vector.multi_reduction <add>, %39, %cst_9 [2] : vector<8x8x8xf32> to vector<8x8xf32>
    %41 = vector.shape_cast %40 : vector<8x8xf32> to vector<8x8x1xf32>
    %42 = tpu.reciprocal %41 {approx = true} : vector<8x8x1xf32> -> vector<8x8x1xf32>
    %43 = vector.broadcast %42 : vector<8x8x1xf32> to vector<8x8x8xf32>
    %44 = arith.mulf %39, %43 : vector<8x8x8xf32>
    %45 = arith.truncf %44 : vector<8x8x8xf32> to vector<8x8x8xbf16>
    "tpu.trace_start"() <{level = 10 : i32, message = "bqk,bkd->bqd"}> : () -> ()
    %cst_10 = arith.constant dense<0.000000e+00> : vector<8x8x16xf32>
    %46 = tpu.matmul %45, %33, %cst_10 {dimension_numbers = #tpu.dot_dimension_numbers<[2], [1], [1], [2], [0, 0, 0, 1, 1, 2], [0], [0]>} : vector<8x8x8xbf16>, vector<8x8x16xbf16>, vector<8x8x16xf32> -> vector<8x8x16xf32>
    "tpu.trace_stop"() : () -> ()
    %47 = vector.extract_strided_slice %46 {offsets = [0, 0, 0], sizes = [2, 8, 16], strides = [1, 1, 1]} : vector<8x8x16xf32> to vector<2x8x16xf32>
    %48 = vector.extract_strided_slice %46 {offsets = [2, 0, 0], sizes = [2, 8, 16], strides = [1, 1, 1]} : vector<8x8x16xf32> to vector<2x8x16xf32>
    %49 = vector.extract_strided_slice %46 {offsets = [4, 0, 0], sizes = [2, 8, 16], strides = [1, 1, 1]} : vector<8x8x16xf32> to vector<2x8x16xf32>
    %50 = vector.extract_strided_slice %46 {offsets = [6, 0, 0], sizes = [2, 8, 16], strides = [1, 1, 1]} : vector<8x8x16xf32> to vector<2x8x16xf32>
    %51 = tpu.concatenate %47, %48, %49, %50 in 2 : vector<2x8x16xf32>, vector<2x8x16xf32>, vector<2x8x16xf32>, vector<2x8x16xf32> -> vector<2x8x64xf32>
    %52 = vector.shape_cast %51 : vector<2x8x64xf32> to vector<16x64xf32>
    %53 = arith.truncf %52 : vector<16x64xf32> to vector<16x64xbf16>
    %c0_11 = arith.constant 0 : index
    %c0_12 = arith.constant 0 : index
    %54 = vector.load %arg4[%c0_11, %c0_12] : memref<64x64xbf16, #tpu.memory_space<vmem>>, vector<64x64xbf16>
    %cst_13 = arith.constant dense<0.000000e+00> : vector<16x64xf32>
    %55 = tpu.matmul %53, %54, %cst_13 {dimension_numbers = #tpu.dot_dimension_numbers<[1], [0], [0], [1], [0, 0, 1, 1], [], []>} : vector<16x64xbf16>, vector<64x64xbf16>, vector<16x64xf32> -> vector<16x64xf32>
    %c0_14 = arith.constant 0 : index
    %c0_15 = arith.constant 0 : index
    %56 = vector.load %arg5[%c0_14, %c0_15] : memref<1x64xf32, #tpu.memory_space<vmem>>, vector<1x64xf32>
    %57 = vector.broadcast %56 : vector<1x64xf32> to vector<16x64xf32>
    %58 = arith.addf %55, %57 : vector<16x64xf32>
    %59 = arith.addf %1, %58 : vector<16x64xf32>
    %60 = arith.truncf %59 : vector<16x64xf32> to vector<16x64xbf16>
    %c0_16 = arith.constant 0 : index
    %c0_17 = arith.constant 0 : index
    %61 = vector.load %arg6[%c0_16, %c0_17] : memref<64x64xbf16, #tpu.memory_space<vmem>>, vector<64x64xbf16>
    %cst_18 = arith.constant dense<0.000000e+00> : vector<16x64xf32>
    %62 = tpu.matmul %60, %61, %cst_18 {dimension_numbers = #tpu.dot_dimension_numbers<[1], [0], [0], [1], [0, 0, 1, 1], [], []>} : vector<16x64xbf16>, vector<64x64xbf16>, vector<16x64xf32> -> vector<16x64xf32>
    %c0_19 = arith.constant 0 : index
    %c0_20 = arith.constant 0 : index
    %63 = vector.load %arg7[%c0_19, %c0_20] : memref<1x64xf32, #tpu.memory_space<vmem>>, vector<1x64xf32>
    %64 = vector.broadcast %63 : vector<1x64xf32> to vector<16x64xf32>
    %65 = arith.addf %62, %64 : vector<16x64xf32>
    %cst_21 = arith.constant 0.000000e+00 : f32
    %66 = vector.broadcast %cst_21 : f32 to vector<16x64xf32>
    %67 = arith.maximumf %65, %66 : vector<16x64xf32>
    %68 = arith.truncf %67 : vector<16x64xf32> to vector<16x64xbf16>
    %c0_22 = arith.constant 0 : index
    %c0_23 = arith.constant 0 : index
    %69 = vector.load %arg8[%c0_22, %c0_23] : memref<64x64xbf16, #tpu.memory_space<vmem>>, vector<64x64xbf16>
    %cst_24 = arith.constant dense<0.000000e+00> : vector<16x64xf32>
    %70 = tpu.matmul %68, %69, %cst_24 {dimension_numbers = #tpu.dot_dimension_numbers<[1], [0], [0], [1], [0, 0, 1, 1], [], []>} : vector<16x64xbf16>, vector<64x64xbf16>, vector<16x64xf32> -> vector<16x64xf32>
    %c0_25 = arith.constant 0 : index
    %c0_26 = arith.constant 0 : index
    %71 = vector.load %arg9[%c0_25, %c0_26] : memref<1x64xf32, #tpu.memory_space<vmem>>, vector<1x64xf32>
    %72 = vector.broadcast %71 : vector<1x64xf32> to vector<16x64xf32>
    %73 = arith.addf %70, %72 : vector<16x64xf32>
    %74 = arith.addf %59, %73 : vector<16x64xf32>
    %c0_27 = arith.constant 0 : index
    %c0_28 = arith.constant 0 : index
    %75 = vector.load %arg10[%c0_27, %c0_28] : memref<1x64xf32, #tpu.memory_space<vmem>>, vector<1x64xf32>
    %c0_29 = arith.constant 0 : index
    %c0_30 = arith.constant 0 : index
    %76 = vector.load %arg11[%c0_29, %c0_30] : memref<1x64xf32, #tpu.memory_space<vmem>>, vector<1x64xf32>
    %cst_31 = arith.constant dense<0.000000e+00> : vector<16xf32>
    %77 = vector.multi_reduction <add>, %74, %cst_31 [1] : vector<16x64xf32> to vector<16xf32>
    %78 = vector.shape_cast %77 : vector<16xf32> to vector<16x1xf32>
    %cst_32 = arith.constant 6.400000e+01 : f32
    %79 = vector.broadcast %cst_32 : f32 to vector<16x1xf32>
    %80 = arith.divf %78, %79 : vector<16x1xf32>
    %81 = vector.broadcast %80 : vector<16x1xf32> to vector<16x64xf32>
    %82 = arith.subf %74, %81 : vector<16x64xf32>
    %83 = arith.mulf %82, %82 : vector<16x64xf32>
    %cst_33 = arith.constant dense<0.000000e+00> : vector<16xf32>
    %84 = vector.multi_reduction <add>, %83, %cst_33 [1] : vector<16x64xf32> to vector<16xf32>
    %85 = vector.shape_cast %84 : vector<16xf32> to vector<16x1xf32>
    %cst_34 = arith.constant 6.400000e+01 : f32
    %86 = vector.broadcast %cst_34 : f32 to vector<16x1xf32>
    %87 = arith.divf %85, %86 : vector<16x1xf32>
    %88 = vector.broadcast %80 : vector<16x1xf32> to vector<16x64xf32>
    %89 = arith.subf %74, %88 : vector<16x64xf32>
    %cst_35 = arith.constant 9.99999974E-6 : f32
    %90 = vector.broadcast %cst_35 : f32 to vector<16x1xf32>
    %91 = arith.addf %87, %90 : vector<16x1xf32>
    %92 = math.rsqrt %91 : vector<16x1xf32>
    %93 = vector.broadcast %92 : vector<16x1xf32> to vector<16x64xf32>
    %94 = arith.mulf %89, %93 : vector<16x64xf32>
    %95 = vector.broadcast %75 : vector<1x64xf32> to vector<16x64xf32>
    %96 = arith.mulf %94, %95 : vector<16x64xf32>
    %97 = vector.broadcast %76 : vector<1x64xf32> to vector<16x64xf32>
    %98 = arith.addf %96, %97 : vector<16x64xf32>
    %c0_36 = arith.constant 0 : index
    %c0_37 = arith.constant 0 : index
    %99 = vector.load %arg12[%c0_36, %c0_37] : memref<1x64xf32, #tpu.memory_space<vmem>>, vector<1x64xf32>
    %c0_38 = arith.constant 0 : index
    %c0_39 = arith.constant 0 : index
    %100 = vector.load %arg13[%c0_38, %c0_39] : memref<1x64xf32, #tpu.memory_space<vmem>>, vector<1x64xf32>
    %cst_40 = arith.constant dense<0.000000e+00> : vector<16xf32>
    %101 = vector.multi_reduction <add>, %98, %cst_40 [1] : vector<16x64xf32> to vector<16xf32>
    %102 = vector.shape_cast %101 : vector<16xf32> to vector<16x1xf32>
    %cst_41 = arith.constant 6.400000e+01 : f32
    %103 = vector.broadcast %cst_41 : f32 to vector<16x1xf32>
    %104 = arith.divf %102, %103 : vector<16x1xf32>
    %105 = vector.broadcast %104 : vector<16x1xf32> to vector<16x64xf32>
    %106 = arith.subf %98, %105 : vector<16x64xf32>
    %107 = arith.mulf %106, %106 : vector<16x64xf32>
    %cst_42 = arith.constant dense<0.000000e+00> : vector<16xf32>
    %108 = vector.multi_reduction <add>, %107, %cst_42 [1] : vector<16x64xf32> to vector<16xf32>
    %109 = vector.shape_cast %108 : vector<16xf32> to vector<16x1xf32>
    %cst_43 = arith.constant 6.400000e+01 : f32
    %110 = vector.broadcast %cst_43 : f32 to vector<16x1xf32>
    %111 = arith.divf %109, %110 : vector<16x1xf32>
    %112 = vector.broadcast %104 : vector<16x1xf32> to vector<16x64xf32>
    %113 = arith.subf %98, %112 : vector<16x64xf32>
    %cst_44 = arith.constant 9.99999974E-6 : f32
    %114 = vector.broadcast %cst_44 : f32 to vector<16x1xf32>
    %115 = arith.addf %111, %114 : vector<16x1xf32>
    %116 = math.rsqrt %115 : vector<16x1xf32>
    %117 = vector.broadcast %116 : vector<16x1xf32> to vector<16x64xf32>
    %118 = arith.mulf %113, %117 : vector<16x64xf32>
    %119 = vector.broadcast %99 : vector<1x64xf32> to vector<16x64xf32>
    %120 = arith.mulf %118, %119 : vector<16x64xf32>
    %121 = vector.broadcast %100 : vector<1x64xf32> to vector<16x64xf32>
    %122 = arith.addf %120, %121 : vector<16x64xf32>
    %123 = vector.shape_cast %122 : vector<16x64xf32> to vector<2x8x64xf32>
    %c0_45 = arith.constant 0 : index
    %c0_46 = arith.constant 0 : index
    %c0_47 = arith.constant 0 : index
    %124 = vector.load %arg14[%c0_45, %c0_46, %c0_47] : memref<2x8x64xf32, #tpu.memory_space<vmem>>, vector<2x8x64xf32>
    tpu.vector_store %arg14[%c0_45, %c0_46, %c0_47], %123 {strides = array<i32>} : memref<2x8x64xf32, #tpu.memory_space<vmem>>, vector<2x8x64xf32>,
    return
  }
  func.func @transform_0(%arg0: i32) -> (i32, i32, i32) {
    %c0_i32 = arith.constant 0 : i32
    %c0_i32_0 = arith.constant 0 : i32
    %c0_i32_1 = arith.constant 0 : i32
    return %arg0, %c0_i32, %c0_i32_0 : i32, i32, i32
  }
  func.func @transform_1(%arg0: i32) -> (i32, i32) {
    %c0_i32 = arith.constant 0 : i32
    %c0_i32_0 = arith.constant 0 : i32
    %c0_i32_1 = arith.constant 0 : i32
    return %c0_i32, %c0_i32_0 : i32, i32
  }
  func.func @transform_2(%arg0: i32) -> (i32, i32) {
    %c0_i32 = arith.constant 0 : i32
    %c0_i32_0 = arith.constant 0 : i32
    %c0_i32_1 = arith.constant 0 : i32
    return %c0_i32, %c0_i32_0 : i32, i32
  }
  func.func @transform_3(%arg0: i32) -> (i32, i32) {
    %c0_i32 = arith.constant 0 : i32
    %c0_i32_0 = arith.constant 0 : i32
    %c0_i32_1 = arith.constant 0 : i32
    return %c0_i32, %c0_i32_0 : i32, i32
  }
  func.func @transform_4(%arg0: i32) -> (i32, i32) {
    %c0_i32 = arith.constant 0 : i32
    %c0_i32_0 = arith.constant 0 : i32
    %c0_i32_1 = arith.constant 0 : i32
    return %c0_i32, %c0_i32_0 : i32, i32
  }
  func.func @transform_5(%arg0: i32) -> (i32, i32) {
    %c0_i32 = arith.constant 0 : i32
    %c0_i32_0 = arith.constant 0 : i32
    %c0_i32_1 = arith.constant 0 : i32
    return %c0_i32, %c0_i32_0 : i32, i32
  }
  func.func @transform_6(%arg0: i32) -> (i32, i32) {
    %c0_i32 = arith.constant 0 : i32
    %c0_i32_0 = arith.constant 0 : i32
    %c0_i32_1 = arith.constant 0 : i32
    return %c0_i32, %c0_i32_0 : i32, i32
  }
  func.func @transform_7(%arg0: i32) -> (i32, i32) {
    %c0_i32 = arith.constant 0 : i32
    %c0_i32_0 = arith.constant 0 : i32
    %c0_i32_1 = arith.constant 0 : i32
    return %c0_i32, %c0_i32_0 : i32, i32
  }
  func.func @transform_8(%arg0: i32) -> (i32, i32) {
    %c0_i32 = arith.constant 0 : i32
    %c0_i32_0 = arith.constant 0 : i32
    %c0_i32_1 = arith.constant 0 : i32
    return %c0_i32, %c0_i32_0 : i32, i32
  }
  func.func @transform_9(%arg0: i32) -> (i32, i32) {
    %c0_i32 = arith.constant 0 : i32
    %c0_i32_0 = arith.constant 0 : i32
    %c0_i32_1 = arith.constant 0 : i32
    return %c0_i32, %c0_i32_0 : i32, i32
  }
  func.func @transform_10(%arg0: i32) -> (i32, i32) {
    %c0_i32 = arith.constant 0 : i32
    %c0_i32_0 = arith.constant 0 : i32
    %c0_i32_1 = arith.constant 0 : i32
    return %c0_i32, %c0_i32_0 : i32, i32
  }
  func.func @transform_11(%arg0: i32) -> (i32, i32) {
    %c0_i32 = arith.constant 0 : i32
    %c0_i32_0 = arith.constant 0 : i32
    %c0_i32_1 = arith.constant 0 : i32
    return %c0_i32, %c0_i32_0 : i32, i32
  }
  func.func @transform_12(%arg0: i32) -> (i32, i32) {
    %c0_i32 = arith.constant 0 : i32
    %c0_i32_0 = arith.constant 0 : i32
    %c0_i32_1 = arith.constant 0 : i32
    return %c0_i32, %c0_i32_0 : i32, i32
  }
  func.func @transform_13(%arg0: i32) -> (i32, i32, i32) {
    %c0_i32 = arith.constant 0 : i32
    %c0_i32_0 = arith.constant 0 : i32
    %c0_i32_1 = arith.constant 0 : i32
    return %arg0, %c0_i32, %c0_i32_0 : i32, i32, i32
  }
}

</mosaic_0001>

<llo_original>
// kernel: tpu_custom_call.1
$region0: #{tpu_custom_call.1}
  #allocation0 [shape = 'u32[]', space=smem, size = 0x4, offset = 0x4, fixed_abs, tag = 'smem constant byte address 0x4 - core index']
  #allocation1 [shape = 'u32[144,128]{1,0:T(1,128)}', space=vmem, size = 0x12000, scoped, tag = 'internal scratch']
  %s0 = inlined_call_operand.hbm [shape: f32[2,8,64], index: 0, kind: input, shape index: {}]
  %s1 = inlined_call_operand.hbm [shape: bf16[64,192], index: 1, kind: input, shape index: {}]
  %s2 = inlined_call_operand.vmem [shape: f32[1,192], index: 2, kind: input, shape index: {}]
  %s3 = inlined_call_operand.hbm [shape: bf16[64,64], index: 3, kind: input, shape index: {}]
  %s4 = inlined_call_operand.vmem [shape: f32[1,64], index: 4, kind: input, shape index: {}]
  %s5 = inlined_call_operand.hbm [shape: bf16[64,64], index: 5, kind: input, shape index: {}]
  %s6 = inlined_call_operand.vmem [shape: f32[1,64], index: 6, kind: input, shape index: {}]
  %s7 = inlined_call_operand.hbm [shape: bf16[64,64], index: 7, kind: input, shape index: {}]
  %s8 = inlined_call_operand.vmem [shape: f32[1,64], index: 8, kind: input, shape index: {}]
  %s9 = inlined_call_operand.vmem [shape: f32[1,64], index: 9, kind: input, shape index: {}]
  %s10 = inlined_call_operand.vmem [shape: f32[1,64], index: 10, kind: input, shape index: {}]
  %s11 = inlined_call_operand.vmem [shape: f32[1,64], index: 11, kind: input, shape index: {}]
  %s12 = inlined_call_operand.vmem [shape: f32[1,64], index: 12, kind: input, shape index: {}]
  %s13 = inlined_call_operand.hbm [shape: f32[2,8,64], index: 13, kind: output, shape index: {}]
  %s14 = sld [smem:[#allocation0]]
  $region82: #{tpu_custom_call.1} parent=0
    _
  %s16 = ssub.s32 1, %s14
  %s17 = scalar_select 0, %s16, %s14
  $region1: #{tpu_custom_call.1} parent=0
    #allocation2 [shape = 'u8[8192]{0}', space=vmem, size = 0x2000, scoped, tag = 'input window, operand 0, single buffered']
    #allocation3 [shape = 's32[1]{0}', space=sflag, size = 0x4, scoped, tag = 'scoped memory for tpu_custom_call.1']
    #allocation4 [shape = 's32[1]{0}', space=sflag, size = 0x4, scoped, tag = 'scoped memory for tpu_custom_call.1']
    #allocation5 [shape = 'u8[32768]{0}', space=vmem, size = 0x8000, scoped, tag = 'input window, operand 1, single buffered']
    #allocation6 [shape = 's32[1]{0}', space=sflag, size = 0x4, scoped, tag = 'scoped memory for tpu_custom_call.1']
    #allocation7 [shape = 'u8[16384]{0}', space=vmem, size = 0x4000, scoped, tag = 'input window, operand 3, single buffered']
    #allocation8 [shape = 'u8[16384]{0}', space=vmem, size = 0x4000, scoped, tag = 'input window, operand 5, single buffered']
    #allocation9 [shape = 's32[1]{0}', space=sflag, size = 0x4, scoped, tag = 'scoped memory for tpu_custom_call.1']
    #allocation10 [shape = 'u8[16384]{0}', space=vmem, size = 0x4000, scoped, tag = 'input window, operand 7, single buffered']
    #allocation11 [shape = 'u8[8192]{0}', space=vmem, size = 0x2000, scoped, tag = 'output window, operand 0, single buffered']
    %18 = vsyncpa [#allocation3], 0
    %19 = vsyncpa [#allocation6], 0
    %20 = vsyncpa [#allocation9], 0
    %21 = vsyncpa [#allocation4], 0
    // Predicated region
    $region2: #{tpu_custom_call.1} parent=1 // pred_check
      _
    $region3: #{tpu_custom_call.1} parent=1 // pred_check_branch
      %23 = sbr.rel (0) target = $region5
    $region4: #{tpu_custom_call.1} parent=1 // pred_region
      %s25 = ssub.s32 256, 256
      %26 = vsyncadd [#allocation3], %s25
      %s27 = sshll.u32 [#allocation2], 4
      %s28 = int_to_ptr.vmem [resolvable:$true] %s27
      %33 = dma.hbm_to_vmem [thread:$0]  %s0, 256, %s28, [#allocation3], 128, 128, 8
    $region5: #{tpu_custom_call.1} parent=1 // pred_fallthru
      _
    // Predicated region
    $region6: #{tpu_custom_call.1} parent=1 // pred_check
      _
    $region7: #{tpu_custom_call.1} parent=1 // pred_check_branch
      %35 = sbr.rel (0) target = $region9
    $region8: #{tpu_custom_call.1} parent=1 // pred_region
      %s37 = ssub.s32 1024, 1024
      %38 = vsyncadd [#allocation6], %s37
      %s39 = sshll.u32 [#allocation5], 4
      %s40 = int_to_ptr.vmem [resolvable:$true] %s39
      %45 = dma.hbm_to_vmem [thread:$0]  %s1, 1024, %s40, [#allocation6], 128, 128, 8
    $region9: #{tpu_custom_call.1} parent=1 // pred_fallthru
      _
    // Predicated region
    $region10: #{tpu_custom_call.1} parent=1 // pred_check
      _
    $region11: #{tpu_custom_call.1} parent=1 // pred_check_branch
      %47 = sbr.rel (0) target = $region13
    $region12: #{tpu_custom_call.1} parent=1 // pred_region
      _
    $region13: #{tpu_custom_call.1} parent=1 // pred_fallthru
      _
    // Predicated region
    $region14: #{tpu_custom_call.1} parent=1 // pred_check
      _
    $region15: #{tpu_custom_call.1} parent=1 // pred_check_branch
      %49 = sbr.rel (0) target = $region17
    $region16: #{tpu_custom_call.1} parent=1 // pred_region
      %s51 = ssub.s32 512, 512
      %52 = vsyncadd [#allocation6], %s51
      %s53 = sshll.u32 [#allocation7], 4
      %s54 = int_to_ptr.vmem [resolvable:$true] %s53
      %59 = dma.hbm_to_vmem [thread:$0]  %s3, 512, %s54, [#allocation6], 64, 64, 4
    $region17: #{tpu_custom_call.1} parent=1 // pred_fallthru
      _
    // Predicated region
    $region18: #{tpu_custom_call.1} parent=1 // pred_check
      _
    $region19: #{tpu_custom_call.1} parent=1 // pred_check_branch
      %61 = sbr.rel (0) target = $region21
    $region20: #{tpu_custom_call.1} parent=1 // pred_region
      _
    $region21: #{tpu_custom_call.1} parent=1 // pred_fallthru
      _
    // Predicated region
    $region22: #{tpu_custom_call.1} parent=1 // pred_check
      _
    $region23: #{tpu_custom_call.1} parent=1 // pred_check_branch
      %63 = sbr.rel (0) target = $region25
    $region24: #{tpu_custom_call.1} parent=1 // pred_region
      %s65 = ssub.s32 512, 512
      %66 = vsyncadd [#allocation9], %s65
      %s67 = sshll.u32 [#allocation8], 4
      %s68 = int_to_ptr.vmem [resolvable:$true] %s67
      %73 = dma.hbm_to_vmem [thread:$0]  %s5, 512, %s68, [#allocation9], 64, 64, 4
    $region25: #{tpu_custom_call.1} parent=1 // pred_fallthru
      _
    // Predicated region
    $region26: #{tpu_custom_call.1} parent=1 // pred_check
      _
    $region27: #{tpu_custom_call.1} parent=1 // pred_check_branch
      %75 = sbr.rel (0) target = $region29
    $region28: #{tpu_custom_call.1} parent=1 // pred_region
      _
    $region29: #{tpu_custom_call.1} parent=1 // pred_fallthru
      _
    // Predicated region
    $region30: #{tpu_custom_call.1} parent=1 // pred_check
      _
    $region31: #{tpu_custom_call.1} parent=1 // pred_check_branch
      %77 = sbr.rel (0) target = $region33
    $region32: #{tpu_custom_call.1} parent=1 // pred_region
      %s79 = ssub.s32 512, 512
      %80 = vsyncadd [#allocation9], %s79
      %s81 = sshll.u32 [#allocation10], 4
      %s82 = int_to_ptr.vmem [resolvable:$true] %s81
      %87 = dma.hbm_to_vmem [thread:$0]  %s7, 512, %s82, [#allocation9], 64, 64, 4
    $region33: #{tpu_custom_call.1} parent=1 // pred_fallthru
      _
    // Predicated region
    $region34: #{tpu_custom_call.1} parent=1 // pred_check
      _
    $region35: #{tpu_custom_call.1} parent=1 // pred_check_branch
      %89 = sbr.rel (0) target = $region37
    $region36: #{tpu_custom_call.1} parent=1 // pred_region
      _
    $region37: #{tpu_custom_call.1} parent=1 // pred_fallthru
      _
    // Predicated region
    $region38: #{tpu_custom_call.1} parent=1 // pred_check
      _
    $region39: #{tpu_custom_call.1} parent=1 // pred_check_branch
      %91 = sbr.rel (0) target = $region41
    $region40: #{tpu_custom_call.1} parent=1 // pred_region
      _
    $region41: #{tpu_custom_call.1} parent=1 // pred_fallthru
      _
    // Predicated region
    $region42: #{tpu_custom_call.1} parent=1 // pred_check
      _
    $region43: #{tpu_custom_call.1} parent=1 // pred_check_branch
      %93 = sbr.rel (0) target = $region45
    $region44: #{tpu_custom_call.1} parent=1 // pred_region
      _
    $region45: #{tpu_custom_call.1} parent=1 // pred_fallthru
      _
    // Predicated region
    $region46: #{tpu_custom_call.1} parent=1 // pred_check
      _
    $region47: #{tpu_custom_call.1} parent=1 // pred_check_branch
      %95 = sbr.rel (0) target = $region49
    $region48: #{tpu_custom_call.1} parent=1 // pred_region
      _
    $region49: #{tpu_custom_call.1} parent=1 // pred_fallthru
      _
    // Predicated region
    $region50: #{tpu_custom_call.1} parent=1 // pred_check
      _
    $region51: #{tpu_custom_call.1} parent=1 // pred_check_branch
      %97 = sbr.rel (0) target = $region53
    $region52: #{tpu_custom_call.1} parent=1 // pred_region
      _
    $region53: #{tpu_custom_call.1} parent=1 // pred_fallthru
      _
    // Predicated region
    $region54: #{tpu_custom_call.1} parent=1 // pred_check
      _
    $region55: #{tpu_custom_call.1} parent=1 // pred_check_branch
      %99 = sbr.rel (0) target = $region57
    $region56: #{tpu_custom_call.1} parent=1 // pred_region
      %100 = dma.done [#allocation3], 256
    $region57: #{tpu_custom_call.1} parent=1 // pred_fallthru
      _
    // Predicated region
    $region58: #{tpu_custom_call.1} parent=1 // pred_check
      _
    $region59: #{tpu_custom_call.1} parent=1 // pred_check_branch
      %102 = sbr.rel (0) target = $region61
    $region60: #{tpu_custom_call.1} parent=1 // pred_region
      %103 = dma.done [#allocation6], 1024
    $region61: #{tpu_custom_call.1} parent=1 // pred_fallthru
      _
    // Predicated region
    $region62: #{tpu_custom_call.1} parent=1 // pred_check
      _
    $region63: #{tpu_custom_call.1} parent=1 // pred_check_branch
      %105 = sbr.rel (0) target = $region65
    $region64: #{tpu_custom_call.1} parent=1 // pred_region
      %106 = dma.done [#allocation6], 512
    $region65: #{tpu_custom_call.1} parent=1 // pred_fallthru
      _
    // Predicated region
    $region66: #{tpu_custom_call.1} parent=1 // pred_check
      _
    $region67: #{tpu_custom_call.1} parent=1 // pred_check_branch
      %108 = sbr.rel (0) target = $region69
    $region68: #{tpu_custom_call.1} parent=1 // pred_region
      %109 = dma.done [#allocation9], 512
    $region69: #{tpu_custom_call.1} parent=1 // pred_fallthru
      _
    // Predicated region
    $region70: #{tpu_custom_call.1} parent=1 // pred_check
      _
    $region71: #{tpu_custom_call.1} parent=1 // pred_check_branch
      %111 = sbr.rel (0) target = $region73
    $region72: #{tpu_custom_call.1} parent=1 // pred_region
      %112 = dma.done [#allocation9], 512
    $region73: #{tpu_custom_call.1} parent=1 // pred_fallthru
      _
    %v114 = vld [vmem:[#allocation2] sm:$0xff]
    %v115 = vld [vmem:[#allocation2 + $0x8] sm:$0xff]
    %v116 = vpack.c.bf16 %v115, %v114
    %v117 = vld [vmem:[#allocation5] sm:$0xff]
    %v118 = vld [vmem:[#allocation5 + $0x8] sm:$0xff]
    %v119 = vld [vmem:[#allocation5 + $0x10] sm:$0xff]
    %v120 = vld [vmem:[#allocation5 + $0x18] sm:$0xff]
    %v121 = vld [vmem:[#allocation5 + $0x20] sm:$0xff]
    %v122 = vld [vmem:[#allocation5 + $0x28] sm:$0xff]
    %v123 = vld [vmem:[#allocation5 + $0x30] sm:$0xff]
    %v124 = vld [vmem:[#allocation5 + $0x38] sm:$0xff]
    %v125 = vld [vmem:[%s2] sm:$0x3]
    %v127 = vlaneseq
    %v128 = vshrl.u32 %v127, 7
    %v129 = vsub.s32 0, %v128
    %v130 = vrot.slane %v125, %v129
    %v131 = vlaneseq
    %v132 = vshrl.u32 %v131, 7
    %v133 = vsub.s32 1, %v132
    %v134 = vrot.slane %v125, %v133
    %v145 = vunpack.c.l.b16 %v117
    %v146 = vunpack.c.h.b16 %v117
    %v147 = vunpack.c.l.b16 %v118
    %v148 = vunpack.c.h.b16 %v118
    %v149 = vunpack.c.l.b16 %v119
    %v150 = vunpack.c.h.b16 %v119
    %v151 = vunpack.c.l.b16 %v120
    %v152 = vunpack.c.h.b16 %v120
    %v153 = vunpack.c.l.b16 %v121
    %v154 = vunpack.c.h.b16 %v121
    %v155 = vunpack.c.l.b16 %v122
    %v156 = vunpack.c.h.b16 %v122
    %v157 = vunpack.c.l.b16 %v123
    %v158 = vunpack.c.h.b16 %v123
    %v159 = vunpack.c.l.b16 %v124
    %v160 = vunpack.c.h.b16 %v124
    %v161 = vpack.c.b16 %v147, %v145
    %v162 = vpack.c.b16 %v148, %v146
    %v163 = vpack.c.b16 %v151, %v149
    %v164 = vpack.c.b16 %v152, %v150
    %v165 = vpack.c.b16 %v155, %v153
    %v166 = vpack.c.b16 %v156, %v154
    %v167 = vpack.c.b16 %v159, %v157
    %v168 = vpack.c.b16 %v160, %v158
    %vm177 = vcmask 523264
    %v179 = vsel %vm177, %v116, 0
    %181 = vmatprep.subr.bf16.mxu0 %v162
    %182 = vmatpush1.bf16.msra.mxu0 %v161
    %183 = vmatprep.subr.bf16.mxu0 %v164
    %184 = vmatpush1.bf16.msra.mxu0 %v163
    %185 = vmatprep.subr.bf16.mxu0 %v166
    %186 = vmatpush1.bf16.msra.mxu0 %v165
    %187 = vmatprep.subr.bf16.mxu0 %v168
    %188 = vmatpush1.bf16.msra.mxu0 %v167
    %189 = vmatprep.subr.bf16.mxu0 0
    %190 = vmatpush1.bf16.msra.mxu0 0
    %191 = vmatprep.subr.bf16.mxu0 0
    %192 = vmatpush1.bf16.msra.mxu0 0
    %193 = vmatprep.subr.bf16.mxu0 0
    %194 = vmatpush1.bf16.msra.mxu0 0
    %195 = vmatprep.subr.bf16.mxu0 0
    %196 = vmatpush1.bf16.msra.mxu0 0
    %197 = vmatprep.subr.bf16.mxu0 0
    %198 = vmatpush1.bf16.msra.mxu0 0
    %199 = vmatprep.subr.bf16.mxu0 0
    %200 = vmatpush1.bf16.msra.mxu0 0
    %201 = vmatprep.subr.bf16.mxu0 0
    %202 = vmatpush1.bf16.msra.mxu0 0
    %203 = vmatprep.subr.bf16.mxu0 0
    %204 = vmatpush1.bf16.msra.mxu0 0
    %205 = vmatprep.subr.bf16.mxu0 0
    %206 = vmatpush1.bf16.msra.mxu0 0
    %207 = vmatprep.subr.bf16.mxu0 0
    %208 = vmatpush1.bf16.msra.mxu0 0
    %209 = vmatprep.subr.bf16.mxu0 0
    %210 = vmatpush1.bf16.msra.mxu0 0
    %211 = vmatprep.subr.bf16.mxu0 0
    %212 = vmatpush1.bf16.msra.mxu0 0
    %213 = vmatprep.mubr.bf16.mxu0 0
    %214 = vmatmul.mubr.bf16.gmra.mrb[0].mxu0 %v179
    %v215 = vpop.f32.mrb[0].mxu0
    %v216 = vadd.f32 %v130, %v215
    %v217 = vpop.f32.mrb[0].mxu0
    %v218 = vadd.f32 %v134, %v217
    %v219 = vpop.f32.mrb[0].mxu0
    %v220 = vadd.f32 %v130, %v219
    %v221 = vpop.f32.mrb[0].mxu0
    %v222 = vadd.f32 %v134, %v221
    %223 = vdwg.mxu0
    %v224 = vmul.f32 %v216, 0.25
    %v225 = vmul.f32 %v220, 0.25
    %228 = vrot.lane.b32.xlu0 %v224, 112
    %v229 = vpop.permute.xlu0 %228
    %230 = vrot.lane.b32.xlu0 %v225, 112
    %v231 = vpop.permute.xlu0 %230
    %234 = vrot.lane.b32.xlu0 %v224, 96
    %v235 = vpop.permute.xlu0 %234
    %236 = vrot.lane.b32.xlu0 %v225, 96
    %v237 = vpop.permute.xlu0 %236
    %240 = vrot.lane.b32.xlu0 %v224, 80
    %v241 = vpop.permute.xlu0 %240
    %242 = vrot.lane.b32.xlu0 %v225, 80
    %v243 = vpop.permute.xlu0 %242
    %v246 = vpack.c.bf16 %v224, %v224
    %v247 = vpack.c.bf16 %v225, %v225
    %v248 = vpack.c.bf16 %v229, %v229
    %v249 = vpack.c.bf16 %v231, %v231
    %v250 = vpack.c.bf16 %v235, %v235
    %v251 = vpack.c.bf16 %v237, %v237
    %v252 = vpack.c.bf16 %v241, %v241
    %v253 = vpack.c.bf16 %v243, %v243
    %256 = vrot.lane.b32.xlu0 %v216, 112
    %v257 = vpop.permute.xlu0 %256
    %258 = vrot.lane.b32.xlu0 %v220, 112
    %v259 = vpop.permute.xlu0 %258
    %262 = vrot.lane.b32.xlu0 %v216, 96
    %v263 = vpop.permute.xlu0 %262
    %264 = vrot.lane.b32.xlu0 %v220, 96
    %v265 = vpop.permute.xlu0 %264
    %268 = vrot.lane.b32.xlu0 %v216, 80
    %v269 = vpop.permute.xlu0 %268
    %270 = vrot.lane.b32.xlu0 %v220, 80
    %v271 = vpop.permute.xlu0 %270
    %v274 = vpack.c.bf16 %v216, %v216
    %v275 = vpack.c.bf16 %v220, %v220
    %v276 = vpack.c.bf16 %v257, %v257
    %v277 = vpack.c.bf16 %v259, %v259
    %v278 = vpack.c.bf16 %v263, %v263
    %v279 = vpack.c.bf16 %v265, %v265
    %v280 = vpack.c.bf16 %v269, %v269
    %v281 = vpack.c.bf16 %v271, %v271
    %284 = vrot.lane.b32.xlu0 %v218, 112
    %v285 = vpop.permute.xlu0 %284
    %286 = vrot.lane.b32.xlu0 %v222, 112
    %v287 = vpop.permute.xlu0 %286
    %290 = vrot.lane.b32.xlu0 %v218, 96
    %v291 = vpop.permute.xlu0 %290
    %292 = vrot.lane.b32.xlu0 %v222, 96
    %v293 = vpop.permute.xlu0 %292
    %296 = vrot.lane.b32.xlu0 %v218, 80
    %v297 = vpop.permute.xlu0 %296
    %298 = vrot.lane.b32.xlu0 %v222, 80
    %v299 = vpop.permute.xlu0 %298
    %v302 = vpack.c.bf16 %v218, %v218
    %v303 = vpack.c.bf16 %v222, %v222
    %v304 = vpack.c.bf16 %v285, %v285
    %v305 = vpack.c.bf16 %v287, %v287
    %v306 = vpack.c.bf16 %v291, %v291
    %v307 = vpack.c.bf16 %v293, %v293
    %v308 = vpack.c.bf16 %v297, %v297
    %v309 = vpack.c.bf16 %v299, %v299
    %311 = vrot.lane.b32.xlu0 %v274, 64
    %v312 = vpop.permute.xlu0 %311
    %vm313 = vcmask 130048
    %v315 = vsel %vm313, %v246, 0
    %v318 = vsel %vm313, %v312, 0
    %320 = vmatprep.subr.bf16.mxu0 0
    %321 = vmatpush1.bf16.xpose.msra.mxu0 %v318
    %322 = vmatprep.subr.bf16.mxu0 0
    %323 = vmatpush1.bf16.xpose.msra.mxu0 0
    %324 = vmatprep.subr.bf16.mxu0 0
    %325 = vmatpush1.bf16.xpose.msra.mxu0 0
    %326 = vmatprep.subr.bf16.mxu0 0
    %327 = vmatpush1.bf16.xpose.msra.mxu0 0
    %328 = vmatprep.subr.bf16.mxu0 0
    %329 = vmatpush1.bf16.xpose.msra.mxu0 0
    %330 = vmatprep.subr.bf16.mxu0 0
    %331 = vmatpush1.bf16.xpose.msra.mxu0 0
    %332 = vmatprep.subr.bf16.mxu0 0
    %333 = vmatpush1.bf16.xpose.msra.mxu0 0
    %334 = vmatprep.subr.bf16.mxu0 0
    %335 = vmatpush1.bf16.xpose.msra.mxu0 0
    %336 = vmatprep.subr.bf16.mxu0 0
    %337 = vmatpush1.bf16.xpose.msra.mxu0 0
    %338 = vmatprep.subr.bf16.mxu0 0
    %339 = vmatpush1.bf16.xpose.msra.mxu0 0
    %340 = vmatprep.subr.bf16.mxu0 0
    %341 = vmatpush1.bf16.xpose.msra.mxu0 0
    %342 = vmatprep.subr.bf16.mxu0 0
    %343 = vmatpush1.bf16.xpose.msra.mxu0 0
    %344 = vmatprep.subr.bf16.mxu0 0
    %345 = vmatpush1.bf16.xpose.msra.mxu0 0
    %346 = vmatprep.subr.bf16.mxu0 0
    %347 = vmatpush1.bf16.xpose.msra.mxu0 0
    %348 = vmatprep.subr.bf16.mxu0 0
    %349 = vmatpush1.bf16.xpose.msra.mxu0 0
    %350 = vmatprep.subr.bf16.mxu0 0
    %351 = vmatpush1.bf16.xpose.msra.mxu0 0
    %352 = vmatprep.mubr.bf16.mxu0 0
    %353 = vmatmul.mubr.bf16.gmra.mrb[0].mxu0 %v315
    %v354 = vpop.f32.mrb[0].mxu0
    %v355 = vadd.f32 0.0, %v354
    %v356 = vpop.f32.mrb[0].mxu0
    %v357 = vpop.f32.mrb[0].mxu0
    %v358 = vpop.f32.mrb[0].mxu0
    %359 = vdwg.mxu0
    %361 = vrot.lane.b32.xlu0 %v275, 64
    %v362 = vpop.permute.xlu0 %361
    %v364 = vsel %vm313, %v247, 0
    %v367 = vsel %vm313, %v362, 0
    %369 = vmatprep.subr.bf16.mxu0 0
    %370 = vmatpush1.bf16.xpose.msra.mxu0 %v367
    %371 = vmatprep.subr.bf16.mxu0 0
    %372 = vmatpush1.bf16.xpose.msra.mxu0 0
    %373 = vmatprep.subr.bf16.mxu0 0
    %374 = vmatpush1.bf16.xpose.msra.mxu0 0
    %375 = vmatprep.subr.bf16.mxu0 0
    %376 = vmatpush1.bf16.xpose.msra.mxu0 0
    %377 = vmatprep.subr.bf16.mxu0 0
    %378 = vmatpush1.bf16.xpose.msra.mxu0 0
    %379 = vmatprep.subr.bf16.mxu0 0
    %380 = vmatpush1.bf16.xpose.msra.mxu0 0
    %381 = vmatprep.subr.bf16.mxu0 0
    %382 = vmatpush1.bf16.xpose.msra.mxu0 0
    %383 = vmatprep.subr.bf16.mxu0 0
    %384 = vmatpush1.bf16.xpose.msra.mxu0 0
    %385 = vmatprep.subr.bf16.mxu0 0
    %386 = vmatpush1.bf16.xpose.msra.mxu0 0
    %387 = vmatprep.subr.bf16.mxu0 0
    %388 = vmatpush1.bf16.xpose.msra.mxu0 0
    %389 = vmatprep.subr.bf16.mxu0 0
    %390 = vmatpush1.bf16.xpose.msra.mxu0 0
    %391 = vmatprep.subr.bf16.mxu0 0
    %392 = vmatpush1.bf16.xpose.msra.mxu0 0
    %393 = vmatprep.subr.bf16.mxu0 0
    %394 = vmatpush1.bf16.xpose.msra.mxu0 0
    %395 = vmatprep.subr.bf16.mxu0 0
    %396 = vmatpush1.bf16.xpose.msra.mxu0 0
    %397 = vmatprep.subr.bf16.mxu0 0
    %398 = vmatpush1.bf16.xpose.msra.mxu0 0
    %399 = vmatprep.subr.bf16.mxu0 0
    %400 = vmatpush1.bf16.xpose.msra.mxu0 0
    %401 = vmatprep.mubr.bf16.mxu0 0
    %402 = vmatmul.mubr.bf16.gmra.mrb[0].mxu0 %v364
    %v403 = vpop.f32.mrb[0].mxu0
    %v404 = vadd.f32 0.0, %v403
    %v405 = vpop.f32.mrb[0].mxu0
    %v406 = vpop.f32.mrb[0].mxu0
    %v407 = vpop.f32.mrb[0].mxu0
    %408 = vdwg.mxu0
    %410 = vrot.lane.b32.xlu0 %v276, 64
    %v411 = vpop.permute.xlu0 %410
    %v413 = vsel %vm313, %v248, 0
    %v416 = vsel %vm313, %v411, 0
    %418 = vmatprep.subr.bf16.mxu0 0
    %419 = vmatpush1.bf16.xpose.msra.mxu0 %v416
    %420 = vmatprep.subr.bf16.mxu0 0
    %421 = vmatpush1.bf16.xpose.msra.mxu0 0
    %422 = vmatprep.subr.bf16.mxu0 0
    %423 = vmatpush1.bf16.xpose.msra.mxu0 0
    %424 = vmatprep.subr.bf16.mxu0 0
    %425 = vmatpush1.bf16.xpose.msra.mxu0 0
    %426 = vmatprep.subr.bf16.mxu0 0
    %427 = vmatpush1.bf16.xpose.msra.mxu0 0
    %428 = vmatprep.subr.bf16.mxu0 0
    %429 = vmatpush1.bf16.xpose.msra.mxu0 0
    %430 = vmatprep.subr.bf16.mxu0 0
    %431 = vmatpush1.bf16.xpose.msra.mxu0 0
    %432 = vmatprep.subr.bf16.mxu0 0
    %433 = vmatpush1.bf16.xpose.msra.mxu0 0
    %434 = vmatprep.subr.bf16.mxu0 0
    %435 = vmatpush1.bf16.xpose.msra.mxu0 0
    %436 = vmatprep.subr.bf16.mxu0 0
    %437 = vmatpush1.bf16.xpose.msra.mxu0 0
    %438 = vmatprep.subr.bf16.mxu0 0
    %439 = vmatpush1.bf16.xpose.msra.mxu0 0
    %440 = vmatprep.subr.bf16.mxu0 0
    %441 = vmatpush1.bf16.xpose.msra.mxu0 0
    %442 = vmatprep.subr.bf16.mxu0 0
    %443 = vmatpush1.bf16.xpose.msra.mxu0 0
    %444 = vmatprep.subr.bf16.mxu0 0
    %445 = vmatpush1.bf16.xpose.msra.mxu0 0
    %446 = vmatprep.subr.bf16.mxu0 0
    %447 = vmatpush1.bf16.xpose.msra.mxu0 0
    %448 = vmatprep.subr.bf16.mxu0 0
    %449 = vmatpush1.bf16.xpose.msra.mxu0 0
    %450 = vmatprep.mubr.bf16.mxu0 0
    %451 = vmatmul.mubr.bf16.gmra.mrb[0].mxu0 %v413
    %v452 = vpop.f32.mrb[0].mxu0
    %v453 = vadd.f32 0.0, %v452
    %v454 = vpop.f32.mrb[0].mxu0
    %v455 = vpop.f32.mrb[0].mxu0
    %v456 = vpop.f32.mrb[0].mxu0
    %457 = vdwg.mxu0
    %459 = vrot.lane.b32.xlu0 %v277, 64
    %v460 = vpop.permute.xlu0 %459
    %v462 = vsel %vm313, %v249, 0
    %v465 = vsel %vm313, %v460, 0
    %467 = vmatprep.subr.bf16.mxu0 0
    %468 = vmatpush1.bf16.xpose.msra.mxu0 %v465
    %469 = vmatprep.subr.bf16.mxu0 0
    %470 = vmatpush1.bf16.xpose.msra.mxu0 0
    %471 = vmatprep.subr.bf16.mxu0 0
    %472 = vmatpush1.bf16.xpose.msra.mxu0 0
    %473 = vmatprep.subr.bf16.mxu0 0
    %474 = vmatpush1.bf16.xpose.msra.mxu0 0
    %475 = vmatprep.subr.bf16.mxu0 0
    %476 = vmatpush1.bf16.xpose.msra.mxu0 0
    %477 = vmatprep.subr.bf16.mxu0 0
    %478 = vmatpush1.bf16.xpose.msra.mxu0 0
    %479 = vmatprep.subr.bf16.mxu0 0
    %480 = vmatpush1.bf16.xpose.msra.mxu0 0
    %481 = vmatprep.subr.bf16.mxu0 0
    %482 = vmatpush1.bf16.xpose.msra.mxu0 0
    %483 = vmatprep.subr.bf16.mxu0 0
    %484 = vmatpush1.bf16.xpose.msra.mxu0 0
    %485 = vmatprep.subr.bf16.mxu0 0
    %486 = vmatpush1.bf16.xpose.msra.mxu0 0
    %487 = vmatprep.subr.bf16.mxu0 0
    %488 = vmatpush1.bf16.xpose.msra.mxu0 0
    %489 = vmatprep.subr.bf16.mxu0 0
    %490 = vmatpush1.bf16.xpose.msra.mxu0 0
    %491 = vmatprep.subr.bf16.mxu0 0
    %492 = vmatpush1.bf16.xpose.msra.mxu0 0
    %493 = vmatprep.subr.bf16.mxu0 0
    %494 = vmatpush1.bf16.xpose.msra.mxu0 0
    %495 = vmatprep.subr.bf16.mxu0 0
    %496 = vmatpush1.bf16.xpose.msra.mxu0 0
    %497 = vmatprep.subr.bf16.mxu0 0
    %498 = vmatpush1.bf16.xpose.msra.mxu0 0
    %499 = vmatprep.mubr.bf16.mxu0 0
    %500 = vmatmul.mubr.bf16.gmra.mrb[0].mxu0 %v462
    %v501 = vpop.f32.mrb[0].mxu0
    %v502 = vadd.f32 0.0, %v501
    %v503 = vpop.f32.mrb[0].mxu0
    %v504 = vpop.f32.mrb[0].mxu0
    %v505 = vpop.f32.mrb[0].mxu0
    %506 = vdwg.mxu0
    %508 = vrot.lane.b32.xlu0 %v278, 64
    %v509 = vpop.permute.xlu0 %508
    %v511 = vsel %vm313, %v250, 0
    %v514 = vsel %vm313, %v509, 0
    %516 = vmatprep.subr.bf16.mxu0 0
    %517 = vmatpush1.bf16.xpose.msra.mxu0 %v514
    %518 = vmatprep.subr.bf16.mxu0 0
    %519 = vmatpush1.bf16.xpose.msra.mxu0 0
    %520 = vmatprep.subr.bf16.mxu0 0
    %521 = vmatpush1.bf16.xpose.msra.mxu0 0
    %522 = vmatprep.subr.bf16.mxu0 0
    %523 = vmatpush1.bf16.xpose.msra.mxu0 0
    %524 = vmatprep.subr.bf16.mxu0 0
    %525 = vmatpush1.bf16.xpose.msra.mxu0 0
    %526 = vmatprep.subr.bf16.mxu0 0
    %527 = vmatpush1.bf16.xpose.msra.mxu0 0
    %528 = vmatprep.subr.bf16.mxu0 0
    %529 = vmatpush1.bf16.xpose.msra.mxu0 0
    %530 = vmatprep.subr.bf16.mxu0 0
    %531 = vmatpush1.bf16.xpose.msra.mxu0 0
    %532 = vmatprep.subr.bf16.mxu0 0
    %533 = vmatpush1.bf16.xpose.msra.mxu0 0
    %534 = vmatprep.subr.bf16.mxu0 0
    %535 = vmatpush1.bf16.xpose.msra.mxu0 0
    %536 = vmatprep.subr.bf16.mxu0 0
    %537 = vmatpush1.bf16.xpose.msra.mxu0 0
    %538 = vmatprep.subr.bf16.mxu0 0
    %539 = vmatpush1.bf16.xpose.msra.mxu0 0
    %540 = vmatprep.subr.bf16.mxu0 0
    %541 = vmatpush1.bf16.xpose.msra.mxu0 0
    %542 = vmatprep.subr.bf16.mxu0 0
    %543 = vmatpush1.bf16.xpose.msra.mxu0 0
    %544 = vmatprep.subr.bf16.mxu0 0
    %545 = vmatpush1.bf16.xpose.msra.mxu0 0
    %546 = vmatprep.subr.bf16.mxu0 0
    %547 = vmatpush1.bf16.xpose.msra.mxu0 0
    %548 = vmatprep.mubr.bf16.mxu0 0
    %549 = vmatmul.mubr.bf16.gmra.mrb[0].mxu0 %v511
    %v550 = vpop.f32.mrb[0].mxu0
    %v551 = vadd.f32 0.0, %v550
    %v552 = vpop.f32.mrb[0].mxu0
    %v553 = vpop.f32.mrb[0].mxu0
    %v554 = vpop.f32.mrb[0].mxu0
    %555 = vdwg.mxu0
    %557 = vrot.lane.b32.xlu0 %v279, 64
    %v558 = vpop.permute.xlu0 %557
    %v560 = vsel %vm313, %v251, 0
    %v563 = vsel %vm313, %v558, 0
    %565 = vmatprep.subr.bf16.mxu0 0
    %566 = vmatpush1.bf16.xpose.msra.mxu0 %v563
    %567 = vmatprep.subr.bf16.mxu0 0
    %568 = vmatpush1.bf16.xpose.msra.mxu0 0
    %569 = vmatprep.subr.bf16.mxu0 0
    %570 = vmatpush1.bf16.xpose.msra.mxu0 0
    %571 = vmatprep.subr.bf16.mxu0 0
    %572 = vmatpush1.bf16.xpose.msra.mxu0 0
    %573 = vmatprep.subr.bf16.mxu0 0
    %574 = vmatpush1.bf16.xpose.msra.mxu0 0
    %575 = vmatprep.subr.bf16.mxu0 0
    %576 = vmatpush1.bf16.xpose.msra.mxu0 0
    %577 = vmatprep.subr.bf16.mxu0 0
    %578 = vmatpush1.bf16.xpose.msra.mxu0 0
    %579 = vmatprep.subr.bf16.mxu0 0
    %580 = vmatpush1.bf16.xpose.msra.mxu0 0
    %581 = vmatprep.subr.bf16.mxu0 0
    %582 = vmatpush1.bf16.xpose.msra.mxu0 0
    %583 = vmatprep.subr.bf16.mxu0 0
    %584 = vmatpush1.bf16.xpose.msra.mxu0 0
    %585 = vmatprep.subr.bf16.mxu0 0
    %586 = vmatpush1.bf16.xpose.msra.mxu0 0
    %587 = vmatprep.subr.bf16.mxu0 0
    %588 = vmatpush1.bf16.xpose.msra.mxu0 0
    %589 = vmatprep.subr.bf16.mxu0 0
    %590 = vmatpush1.bf16.xpose.msra.mxu0 0
    %591 = vmatprep.subr.bf16.mxu0 0
    %592 = vmatpush1.bf16.xpose.msra.mxu0 0
    %593 = vmatprep.subr.bf16.mxu0 0
    %594 = vmatpush1.bf16.xpose.msra.mxu0 0
    %595 = vmatprep.subr.bf16.mxu0 0
    %596 = vmatpush1.bf16.xpose.msra.mxu0 0
    %597 = vmatprep.mubr.bf16.mxu0 0
    %598 = vmatmul.mubr.bf16.gmra.mrb[0].mxu0 %v560
    %v599 = vpop.f32.mrb[0].mxu0
    %v600 = vadd.f32 0.0, %v599
    %v601 = vpop.f32.mrb[0].mxu0
    %v602 = vpop.f32.mrb[0].mxu0
    %v603 = vpop.f32.mrb[0].mxu0
    %604 = vdwg.mxu0
    %606 = vrot.lane.b32.xlu0 %v280, 64
    %v607 = vpop.permute.xlu0 %606
    %v609 = vsel %vm313, %v252, 0
    %v612 = vsel %vm313, %v607, 0
    %614 = vmatprep.subr.bf16.mxu0 0
    %615 = vmatpush1.bf16.xpose.msra.mxu0 %v612
    %616 = vmatprep.subr.bf16.mxu0 0
    %617 = vmatpush1.bf16.xpose.msra.mxu0 0
    %618 = vmatprep.subr.bf16.mxu0 0
    %619 = vmatpush1.bf16.xpose.msra.mxu0 0
    %620 = vmatprep.subr.bf16.mxu0 0
    %621 = vmatpush1.bf16.xpose.msra.mxu0 0
    %622 = vmatprep.subr.bf16.mxu0 0
    %623 = vmatpush1.bf16.xpose.msra.mxu0 0
    %624 = vmatprep.subr.bf16.mxu0 0
    %625 = vmatpush1.bf16.xpose.msra.mxu0 0
    %626 = vmatprep.subr.bf16.mxu0 0
    %627 = vmatpush1.bf16.xpose.msra.mxu0 0
    %628 = vmatprep.subr.bf16.mxu0 0
    %629 = vmatpush1.bf16.xpose.msra.mxu0 0
    %630 = vmatprep.subr.bf16.mxu0 0
    %631 = vmatpush1.bf16.xpose.msra.mxu0 0
    %632 = vmatprep.subr.bf16.mxu0 0
    %633 = vmatpush1.bf16.xpose.msra.mxu0 0
    %634 = vmatprep.subr.bf16.mxu0 0
    %635 = vmatpush1.bf16.xpose.msra.mxu0 0
    %636 = vmatprep.subr.bf16.mxu0 0
    %637 = vmatpush1.bf16.xpose.msra.mxu0 0
    %638 = vmatprep.subr.bf16.mxu0 0
    %639 = vmatpush1.bf16.xpose.msra.mxu0 0
    %640 = vmatprep.subr.bf16.mxu0 0
    %641 = vmatpush1.bf16.xpose.msra.mxu0 0
    %642 = vmatprep.subr.bf16.mxu0 0
    %643 = vmatpush1.bf16.xpose.msra.mxu0 0
    %644 = vmatprep.subr.bf16.mxu0 0
    %645 = vmatpush1.bf16.xpose.msra.mxu0 0
    %646 = vmatprep.mubr.bf16.mxu0 0
    %647 = vmatmul.mubr.bf16.gmra.mrb[0].mxu0 %v609
    %v648 = vpop.f32.mrb[0].mxu0
    %v649 = vadd.f32 0.0, %v648
    %v650 = vpop.f32.mrb[0].mxu0
    %v651 = vpop.f32.mrb[0].mxu0
    %v652 = vpop.f32.mrb[0].mxu0
    %653 = vdwg.mxu0
    %655 = vrot.lane.b32.xlu0 %v281, 64
    %v656 = vpop.permute.xlu0 %655
    %v658 = vsel %vm313, %v253, 0
    %v661 = vsel %vm313, %v656, 0
    %663 = vmatprep.subr.bf16.mxu0 0
    %664 = vmatpush1.bf16.xpose.msra.mxu0 %v661
    %665 = vmatprep.subr.bf16.mxu0 0
    %666 = vmatpush1.bf16.xpose.msra.mxu0 0
    %667 = vmatprep.subr.bf16.mxu0 0
    %668 = vmatpush1.bf16.xpose.msra.mxu0 0
    %669 = vmatprep.subr.bf16.mxu0 0
    %670 = vmatpush1.bf16.xpose.msra.mxu0 0
    %671 = vmatprep.subr.bf16.mxu0 0
    %672 = vmatpush1.bf16.xpose.msra.mxu0 0
    %673 = vmatprep.subr.bf16.mxu0 0
    %674 = vmatpush1.bf16.xpose.msra.mxu0 0
    %675 = vmatprep.subr.bf16.mxu0 0
    %676 = vmatpush1.bf16.xpose.msra.mxu0 0
    %677 = vmatprep.subr.bf16.mxu0 0
    %678 = vmatpush1.bf16.xpose.msra.mxu0 0
    %679 = vmatprep.subr.bf16.mxu0 0
    %680 = vmatpush1.bf16.xpose.msra.mxu0 0
    %681 = vmatprep.subr.bf16.mxu0 0
    %682 = vmatpush1.bf16.xpose.msra.mxu0 0
    %683 = vmatprep.subr.bf16.mxu0 0
    %684 = vmatpush1.bf16.xpose.msra.mxu0 0
    %685 = vmatprep.subr.bf16.mxu0 0
    %686 = vmatpush1.bf16.xpose.msra.mxu0 0
    %687 = vmatprep.subr.bf16.mxu0 0
    %688 = vmatpush1.bf16.xpose.msra.mxu0 0
    %689 = vmatprep.subr.bf16.mxu0 0
    %690 = vmatpush1.bf16.xpose.msra.mxu0 0
    %691 = vmatprep.subr.bf16.mxu0 0
    %692 = vmatpush1.bf16.xpose.msra.mxu0 0
    %693 = vmatprep.subr.bf16.mxu0 0
    %694 = vmatpush1.bf16.xpose.msra.mxu0 0
    %695 = vmatprep.mubr.bf16.mxu0 0
    %696 = vmatmul.mubr.bf16.gmra.mrb[0].mxu0 %v658
    %v697 = vpop.f32.mrb[0].mxu0
    %v698 = vadd.f32 0.0, %v697
    %v699 = vpop.f32.mrb[0].mxu0
    %v700 = vpop.f32.mrb[0].mxu0
    %v701 = vpop.f32.mrb[0].mxu0
    %702 = vdwg.mxu0
    %vm703 = vcmask 64512
    %v704 = vsel %vm703, %v355, -inf
    %705 = vmax.xlane.f32.xlu0 %v704
    %v706 = vpop.xlane.xlu0 %705
    %v707 = vsel %vm703, %v404, -inf
    %708 = vmax.xlane.f32.xlu0 %v707
    %v709 = vpop.xlane.xlu0 %708
    %v710 = vsel %vm703, %v453, -inf
    %711 = vmax.xlane.f32.xlu0 %v710
    %v712 = vpop.xlane.xlu0 %711
    %v713 = vsel %vm703, %v502, -inf
    %714 = vmax.xlane.f32.xlu0 %v713
    %v715 = vpop.xlane.xlu0 %714
    %v716 = vsel %vm703, %v551, -inf
    %717 = vmax.xlane.f32.xlu0 %v716
    %v718 = vpop.xlane.xlu0 %717
    %v719 = vsel %vm703, %v600, -inf
    %720 = vmax.xlane.f32.xlu0 %v719
    %v721 = vpop.xlane.xlu0 %720
    %v722 = vsel %vm703, %v649, -inf
    %723 = vmax.xlane.f32.xlu0 %v722
    %v724 = vpop.xlane.xlu0 %723
    %v725 = vsel %vm703, %v698, -inf
    %726 = vmax.xlane.f32.xlu0 %v725
    %v727 = vpop.xlane.xlu0 %726
    %v728 = vsub.f32 %v355, %v706
    %v729 = vsub.f32 %v404, %v709
    %v730 = vsub.f32 %v453, %v712
    %v731 = vsub.f32 %v502, %v715
    %v732 = vsub.f32 %v551, %v718
    %v733 = vsub.f32 %v600, %v721
    %v734 = vsub.f32 %v649, %v724
    %v735 = vsub.f32 %v698, %v727
    %v736 = vmul.f32 %v728, 1.442695
    %v737 = vpow.pop %v736
    %v738 = vmul.f32 %v729, 1.442695
    %v739 = vpow.pop %v738
    %v740 = vmul.f32 %v730, 1.442695
    %v741 = vpow.pop %v740
    %v742 = vmul.f32 %v731, 1.442695
    %v743 = vpow.pop %v742
    %v744 = vmul.f32 %v732, 1.442695
    %v745 = vpow.pop %v744
    %v746 = vmul.f32 %v733, 1.442695
    %v747 = vpow.pop %v746
    %v748 = vmul.f32 %v734, 1.442695
    %v749 = vpow.pop %v748
    %v750 = vmul.f32 %v735, 1.442695
    %v751 = vpow.pop %v750
    %v752 = vsel %vm703, %v737, 0.0
    %753 = vadd.xlane.f32.xlu0 %v752
    %v754 = vpop.xlane.xlu0 %753
    %v755 = vsel %vm703, %v739, 0.0
    %756 = vadd.xlane.f32.xlu0 %v755
    %v757 = vpop.xlane.xlu0 %756
    %v758 = vsel %vm703, %v741, 0.0
    %759 = vadd.xlane.f32.xlu0 %v758
    %v760 = vpop.xlane.xlu0 %759
    %v761 = vsel %vm703, %v743, 0.0
    %762 = vadd.xlane.f32.xlu0 %v761
    %v763 = vpop.xlane.xlu0 %762
    %v764 = vsel %vm703, %v745, 0.0
    %765 = vadd.xlane.f32.xlu0 %v764
    %v766 = vpop.xlane.xlu0 %765
    %v767 = vsel %vm703, %v747, 0.0
    %768 = vadd.xlane.f32.xlu0 %v767
    %v769 = vpop.xlane.xlu0 %768
    %v770 = vsel %vm703, %v749, 0.0
    %771 = vadd.xlane.f32.xlu0 %v770
    %v772 = vpop.xlane.xlu0 %771
    %v773 = vsel %vm703, %v751, 0.0
    %774 = vadd.xlane.f32.xlu0 %v773
    %v775 = vpop.xlane.xlu0 %774
    %v776 = vrcp.pop %v754
    %v777 = vrcp.pop %v757
    %v778 = vrcp.pop %v760
    %v779 = vrcp.pop %v763
    %v780 = vrcp.pop %v766
    %v781 = vrcp.pop %v769
    %v782 = vrcp.pop %v772
    %v783 = vrcp.pop %v775
    %v784 = vmul.f32 %v737, %v776
    %v785 = vmul.f32 %v739, %v777
    %v786 = vmul.f32 %v741, %v778
    %v787 = vmul.f32 %v743, %v779
    %v788 = vmul.f32 %v745, %v780
    %v789 = vmul.f32 %v747, %v781
    %v790 = vmul.f32 %v749, %v782
    %v791 = vmul.f32 %v751, %v783
    %v792 = vpack.c.bf16 %v784, %v784
    %v793 = vpack.c.bf16 %v785, %v785
    %v794 = vpack.c.bf16 %v786, %v786
    %v795 = vpack.c.bf16 %v787, %v787
    %v796 = vpack.c.bf16 %v788, %v788
    %v797 = vpack.c.bf16 %v789, %v789
    %v798 = vpack.c.bf16 %v790, %v790
    %v799 = vpack.c.bf16 %v791, %v791
    %v801 = vsel %vm703, %v792, 0
    %vm803 = vcmask 1043456
    %v805 = vsel %vm803, %v302, 0
    %807 = vmatprep.subr.bf16.mxu0 0
    %808 = vmatpush1.bf16.msra.mxu0 %v805
    %809 = vmatprep.subr.bf16.mxu0 0
    %810 = vmatpush1.bf16.msra.mxu0 0
    %811 = vmatprep.subr.bf16.mxu0 0
    %812 = vmatpush1.bf16.msra.mxu0 0
    %813 = vmatprep.subr.bf16.mxu0 0
    %814 = vmatpush1.bf16.msra.mxu0 0
    %815 = vmatprep.subr.bf16.mxu0 0
    %816 = vmatpush1.bf16.msra.mxu0 0
    %817 = vmatprep.subr.bf16.mxu0 0
    %818 = vmatpush1.bf16.msra.mxu0 0
    %819 = vmatprep.subr.bf16.mxu0 0
    %820 = vmatpush1.bf16.msra.mxu0 0
    %821 = vmatprep.subr.bf16.mxu0 0
    %822 = vmatpush1.bf16.msra.mxu0 0
    %823 = vmatprep.subr.bf16.mxu0 0
    %824 = vmatpush1.bf16.msra.mxu0 0
    %825 = vmatprep.subr.bf16.mxu0 0
    %826 = vmatpush1.bf16.msra.mxu0 0
    %827 = vmatprep.subr.bf16.mxu0 0
    %828 = vmatpush1.bf16.msra.mxu0 0
    %829 = vmatprep.subr.bf16.mxu0 0
    %830 = vmatpush1.bf16.msra.mxu0 0
    %831 = vmatprep.subr.bf16.mxu0 0
    %832 = vmatpush1.bf16.msra.mxu0 0
    %833 = vmatprep.subr.bf16.mxu0 0
    %834 = vmatpush1.bf16.msra.mxu0 0
    %835 = vmatprep.subr.bf16.mxu0 0
    %836 = vmatpush1.bf16.msra.mxu0 0
    %837 = vmatprep.subr.bf16.mxu0 0
    %838 = vmatpush1.bf16.msra.mxu0 0
    %839 = vmatprep.mubr.bf16.mxu0 0
    %840 = vmatmul.mubr.bf16.gmra.mrb[0].mxu0 %v801
    %v841 = vpop.f32.mrb[0].mxu0
    %v842 = vadd.f32 0.0, %v841
    %v843 = vpop.f32.mrb[0].mxu0
    %v844 = vpop.f32.mrb[0].mxu0
    %v845 = vpop.f32.mrb[0].mxu0
    %846 = vdwg.mxu0
    %v848 = vsel %vm703, %v793, 0
    %v851 = vsel %vm803, %v303, 0
    %853 = vmatprep.subr.bf16.mxu0 0
    %854 = vmatpush1.bf16.msra.mxu0 %v851
    %855 = vmatprep.subr.bf16.mxu0 0
    %856 = vmatpush1.bf16.msra.mxu0 0
    %857 = vmatprep.subr.bf16.mxu0 0
    %858 = vmatpush1.bf16.msra.mxu0 0
    %859 = vmatprep.subr.bf16.mxu0 0
    %860 = vmatpush1.bf16.msra.mxu0 0
    %861 = vmatprep.subr.bf16.mxu0 0
    %862 = vmatpush1.bf16.msra.mxu0 0
    %863 = vmatprep.subr.bf16.mxu0 0
    %864 = vmatpush1.bf16.msra.mxu0 0
    %865 = vmatprep.subr.bf16.mxu0 0
    %866 = vmatpush1.bf16.msra.mxu0 0
    %867 = vmatprep.subr.bf16.mxu0 0
    %868 = vmatpush1.bf16.msra.mxu0 0
    %869 = vmatprep.subr.bf16.mxu0 0
    %870 = vmatpush1.bf16.msra.mxu0 0
    %871 = vmatprep.subr.bf16.mxu0 0
    %872 = vmatpush1.bf16.msra.mxu0 0
    %873 = vmatprep.subr.bf16.mxu0 0
    %874 = vmatpush1.bf16.msra.mxu0 0
    %875 = vmatprep.subr.bf16.mxu0 0
    %876 = vmatpush1.bf16.msra.mxu0 0
    %877 = vmatprep.subr.bf16.mxu0 0
    %878 = vmatpush1.bf16.msra.mxu0 0
    %879 = vmatprep.subr.bf16.mxu0 0
    %880 = vmatpush1.bf16.msra.mxu0 0
    %881 = vmatprep.subr.bf16.mxu0 0
    %882 = vmatpush1.bf16.msra.mxu0 0
    %883 = vmatprep.subr.bf16.mxu0 0
    %884 = vmatpush1.bf16.msra.mxu0 0
    %885 = vmatprep.mubr.bf16.mxu0 0
    %886 = vmatmul.mubr.bf16.gmra.mrb[0].mxu0 %v848
    %v887 = vpop.f32.mrb[0].mxu0
    %v888 = vadd.f32 0.0, %v887
    %v889 = vpop.f32.mrb[0].mxu0
    %v890 = vpop.f32.mrb[0].mxu0
    %v891 = vpop.f32.mrb[0].mxu0
    %892 = vdwg.mxu0
    %v894 = vsel %vm703, %v794, 0
    %v897 = vsel %vm803, %v304, 0
    %899 = vmatprep.subr.bf16.mxu0 0
    %900 = vmatpush1.bf16.msra.mxu0 %v897
    %901 = vmatprep.subr.bf16.mxu0 0
    %902 = vmatpush1.bf16.msra.mxu0 0
    %903 = vmatprep.subr.bf16.mxu0 0
    %904 = vmatpush1.bf16.msra.mxu0 0
    %905 = vmatprep.subr.bf16.mxu0 0
    %906 = vmatpush1.bf16.msra.mxu0 0
    %907 = vmatprep.subr.bf16.mxu0 0
    %908 = vmatpush1.bf16.msra.mxu0 0
    %909 = vmatprep.subr.bf16.mxu0 0
    %910 = vmatpush1.bf16.msra.mxu0 0
    %911 = vmatprep.subr.bf16.mxu0 0
    %912 = vmatpush1.bf16.msra.mxu0 0
    %913 = vmatprep.subr.bf16.mxu0 0
    %914 = vmatpush1.bf16.msra.mxu0 0
    %915 = vmatprep.subr.bf16.mxu0 0
    %916 = vmatpush1.bf16.msra.mxu0 0
    %917 = vmatprep.subr.bf16.mxu0 0
    %918 = vmatpush1.bf16.msra.mxu0 0
    %919 = vmatprep.subr.bf16.mxu0 0
    %920 = vmatpush1.bf16.msra.mxu0 0
    %921 = vmatprep.subr.bf16.mxu0 0
    %922 = vmatpush1.bf16.msra.mxu0 0
    %923 = vmatprep.subr.bf16.mxu0 0
    %924 = vmatpush1.bf16.msra.mxu0 0
    %925 = vmatprep.subr.bf16.mxu0 0
    %926 = vmatpush1.bf16.msra.mxu0 0
    %927 = vmatprep.subr.bf16.mxu0 0
    %928 = vmatpush1.bf16.msra.mxu0 0
    %929 = vmatprep.subr.bf16.mxu0 0
    %930 = vmatpush1.bf16.msra.mxu0 0
    %931 = vmatprep.mubr.bf16.mxu0 0
    %932 = vmatmul.mubr.bf16.gmra.mrb[0].mxu0 %v894
    %v933 = vpop.f32.mrb[0].mxu0
    %v934 = vadd.f32 0.0, %v933
    %v935 = vpop.f32.mrb[0].mxu0
    %v936 = vpop.f32.mrb[0].mxu0
    %v937 = vpop.f32.mrb[0].mxu0
    %938 = vdwg.mxu0
    %v940 = vsel %vm703, %v795, 0
    %v943 = vsel %vm803, %v305, 0
    %945 = vmatprep.subr.bf16.mxu0 0
    %946 = vmatpush1.bf16.msra.mxu0 %v943
    %947 = vmatprep.subr.bf16.mxu0 0
    %948 = vmatpush1.bf16.msra.mxu0 0
    %949 = vmatprep.subr.bf16.mxu0 0
    %950 = vmatpush1.bf16.msra.mxu0 0
    %951 = vmatprep.subr.bf16.mxu0 0
    %952 = vmatpush1.bf16.msra.mxu0 0
    %953 = vmatprep.subr.bf16.mxu0 0
    %954 = vmatpush1.bf16.msra.mxu0 0
    %955 = vmatprep.subr.bf16.mxu0 0
    %956 = vmatpush1.bf16.msra.mxu0 0
    %957 = vmatprep.subr.bf16.mxu0 0
    %958 = vmatpush1.bf16.msra.mxu0 0
    %959 = vmatprep.subr.bf16.mxu0 0
    %960 = vmatpush1.bf16.msra.mxu0 0
    %961 = vmatprep.subr.bf16.mxu0 0
    %962 = vmatpush1.bf16.msra.mxu0 0
    %963 = vmatprep.subr.bf16.mxu0 0
    %964 = vmatpush1.bf16.msra.mxu0 0
    %965 = vmatprep.subr.bf16.mxu0 0
    %966 = vmatpush1.bf16.msra.mxu0 0
    %967 = vmatprep.subr.bf16.mxu0 0
    %968 = vmatpush1.bf16.msra.mxu0 0
    %969 = vmatprep.subr.bf16.mxu0 0
    %970 = vmatpush1.bf16.msra.mxu0 0
    %971 = vmatprep.subr.bf16.mxu0 0
    %972 = vmatpush1.bf16.msra.mxu0 0
    %973 = vmatprep.subr.bf16.mxu0 0
    %974 = vmatpush1.bf16.msra.mxu0 0
    %975 = vmatprep.subr.bf16.mxu0 0
    %976 = vmatpush1.bf16.msra.mxu0 0
    %977 = vmatprep.mubr.bf16.mxu0 0
    %978 = vmatmul.mubr.bf16.gmra.mrb[0].mxu0 %v940
    %v979 = vpop.f32.mrb[0].mxu0
    %v980 = vadd.f32 0.0, %v979
    %v981 = vpop.f32.mrb[0].mxu0
    %v982 = vpop.f32.mrb[0].mxu0
    %v983 = vpop.f32.mrb[0].mxu0
    %984 = vdwg.mxu0
    %v986 = vsel %vm703, %v796, 0
    %v989 = vsel %vm803, %v306, 0
    %991 = vmatprep.subr.bf16.mxu0 0
    %992 = vmatpush1.bf16.msra.mxu0 %v989
    %993 = vmatprep.subr.bf16.mxu0 0
    %994 = vmatpush1.bf16.msra.mxu0 0
    %995 = vmatprep.subr.bf16.mxu0 0
    %996 = vmatpush1.bf16.msra.mxu0 0
    %997 = vmatprep.subr.bf16.mxu0 0
    %998 = vmatpush1.bf16.msra.mxu0 0
    %999 = vmatprep.subr.bf16.mxu0 0
    %1000 = vmatpush1.bf16.msra.mxu0 0
    %1001 = vmatprep.subr.bf16.mxu0 0
    %1002 = vmatpush1.bf16.msra.mxu0 0
    %1003 = vmatprep.subr.bf16.mxu0 0
    %1004 = vmatpush1.bf16.msra.mxu0 0
    %1005 = vmatprep.subr.bf16.mxu0 0
    %1006 = vmatpush1.bf16.msra.mxu0 0
    %1007 = vmatprep.subr.bf16.mxu0 0
    %1008 = vmatpush1.bf16.msra.mxu0 0
    %1009 = vmatprep.subr.bf16.mxu0 0
    %1010 = vmatpush1.bf16.msra.mxu0 0
    %1011 = vmatprep.subr.bf16.mxu0 0
    %1012 = vmatpush1.bf16.msra.mxu0 0
    %1013 = vmatprep.subr.bf16.mxu0 0
    %1014 = vmatpush1.bf16.msra.mxu0 0
    %1015 = vmatprep.subr.bf16.mxu0 0
    %1016 = vmatpush1.bf16.msra.mxu0 0
    %1017 = vmatprep.subr.bf16.mxu0 0
    %1018 = vmatpush1.bf16.msra.mxu0 0
    %1019 = vmatprep.subr.bf16.mxu0 0
    %1020 = vmatpush1.bf16.msra.mxu0 0
    %1021 = vmatprep.subr.bf16.mxu0 0
    %1022 = vmatpush1.bf16.msra.mxu0 0
    %1023 = vmatprep.mubr.bf16.mxu0 0
    %1024 = vmatmul.mubr.bf16.gmra.mrb[0].mxu0 %v986
    %v1025 = vpop.f32.mrb[0].mxu0
    %v1026 = vadd.f32 0.0, %v1025
    %v1027 = vpop.f32.mrb[0].mxu0
    %v1028 = vpop.f32.mrb[0].mxu0
    %v1029 = vpop.f32.mrb[0].mxu0
    %1030 = vdwg.mxu0
    %v1032 = vsel %vm703, %v797, 0
    %v1035 = vsel %vm803, %v307, 0
    %1037 = vmatprep.subr.bf16.mxu0 0
    %1038 = vmatpush1.bf16.msra.mxu0 %v1035
    %1039 = vmatprep.subr.bf16.mxu0 0
    %1040 = vmatpush1.bf16.msra.mxu0 0
    %1041 = vmatprep.subr.bf16.mxu0 0
    %1042 = vmatpush1.bf16.msra.mxu0 0
    %1043 = vmatprep.subr.bf16.mxu0 0
    %1044 = vmatpush1.bf16.msra.mxu0 0
    %1045 = vmatprep.subr.bf16.mxu0 0
    %1046 = vmatpush1.bf16.msra.mxu0 0
    %1047 = vmatprep.subr.bf16.mxu0 0
    %1048 = vmatpush1.bf16.msra.mxu0 0
    %1049 = vmatprep.subr.bf16.mxu0 0
    %1050 = vmatpush1.bf16.msra.mxu0 0
    %1051 = vmatprep.subr.bf16.mxu0 0
    %1052 = vmatpush1.bf16.msra.mxu0 0
    %1053 = vmatprep.subr.bf16.mxu0 0
    %1054 = vmatpush1.bf16.msra.mxu0 0
    %1055 = vmatprep.subr.bf16.mxu0 0
    %1056 = vmatpush1.bf16.msra.mxu0 0
    %1057 = vmatprep.subr.bf16.mxu0 0
    %1058 = vmatpush1.bf16.msra.mxu0 0
    %1059 = vmatprep.subr.bf16.mxu0 0
    %1060 = vmatpush1.bf16.msra.mxu0 0
    %1061 = vmatprep.subr.bf16.mxu0 0
    %1062 = vmatpush1.bf16.msra.mxu0 0
    %1063 = vmatprep.subr.bf16.mxu0 0
    %1064 = vmatpush1.bf16.msra.mxu0 0
    %1065 = vmatprep.subr.bf16.mxu0 0
    %1066 = vmatpush1.bf16.msra.mxu0 0
    %1067 = vmatprep.subr.bf16.mxu0 0
    %1068 = vmatpush1.bf16.msra.mxu0 0
    %1069 = vmatprep.mubr.bf16.mxu0 0
    %1070 = vmatmul.mubr.bf16.gmra.mrb[0].mxu0 %v1032
    %v1071 = vpop.f32.mrb[0].mxu0
    %v1072 = vadd.f32 0.0, %v1071
    %v1073 = vpop.f32.mrb[0].mxu0
    %v1074 = vpop.f32.mrb[0].mxu0
    %v1075 = vpop.f32.mrb[0].mxu0
    %1076 = vdwg.mxu0
    %v1078 = vsel %vm703, %v798, 0
    %v1081 = vsel %vm803, %v308, 0
    %1083 = vmatprep.subr.bf16.mxu0 0
    %1084 = vmatpush1.bf16.msra.mxu0 %v1081
    %1085 = vmatprep.subr.bf16.mxu0 0
    %1086 = vmatpush1.bf16.msra.mxu0 0
    %1087 = vmatprep.subr.bf16.mxu0 0
    %1088 = vmatpush1.bf16.msra.mxu0 0
    %1089 = vmatprep.subr.bf16.mxu0 0
    %1090 = vmatpush1.bf16.msra.mxu0 0
    %1091 = vmatprep.subr.bf16.mxu0 0
    %1092 = vmatpush1.bf16.msra.mxu0 0
    %1093 = vmatprep.subr.bf16.mxu0 0
    %1094 = vmatpush1.bf16.msra.mxu0 0
    %1095 = vmatprep.subr.bf16.mxu0 0
    %1096 = vmatpush1.bf16.msra.mxu0 0
    %1097 = vmatprep.subr.bf16.mxu0 0
    %1098 = vmatpush1.bf16.msra.mxu0 0
    %1099 = vmatprep.subr.bf16.mxu0 0
    %1100 = vmatpush1.bf16.msra.mxu0 0
    %1101 = vmatprep.subr.bf16.mxu0 0
    %1102 = vmatpush1.bf16.msra.mxu0 0
    %1103 = vmatprep.subr.bf16.mxu0 0
    %1104 = vmatpush1.bf16.msra.mxu0 0
    %1105 = vmatprep.subr.bf16.mxu0 0
    %1106 = vmatpush1.bf16.msra.mxu0 0
    %1107 = vmatprep.subr.bf16.mxu0 0
    %1108 = vmatpush1.bf16.msra.mxu0 0
    %1109 = vmatprep.subr.bf16.mxu0 0
    %1110 = vmatpush1.bf16.msra.mxu0 0
    %1111 = vmatprep.subr.bf16.mxu0 0
    %1112 = vmatpush1.bf16.msra.mxu0 0
    %1113 = vmatprep.subr.bf16.mxu0 0
    %1114 = vmatpush1.bf16.msra.mxu0 0
    %1115 = vmatprep.mubr.bf16.mxu0 0
    %1116 = vmatmul.mubr.bf16.gmra.mrb[0].mxu0 %v1078
    %v1117 = vpop.f32.mrb[0].mxu0
    %v1118 = vadd.f32 0.0, %v1117
    %v1119 = vpop.f32.mrb[0].mxu0
    %v1120 = vpop.f32.mrb[0].mxu0
    %v1121 = vpop.f32.mrb[0].mxu0
    %1122 = vdwg.mxu0
    %v1124 = vsel %vm703, %v799, 0
    %v1127 = vsel %vm803, %v309, 0
    %1129 = vmatprep.subr.bf16.mxu0 0
    %1130 = vmatpush1.bf16.msra.mxu0 %v1127
    %1131 = vmatprep.subr.bf16.mxu0 0
    %1132 = vmatpush1.bf16.msra.mxu0 0
    %1133 = vmatprep.subr.bf16.mxu0 0
    %1134 = vmatpush1.bf16.msra.mxu0 0
    %1135 = vmatprep.subr.bf16.mxu0 0
    %1136 = vmatpush1.bf16.msra.mxu0 0
    %1137 = vmatprep.subr.bf16.mxu0 0
    %1138 = vmatpush1.bf16.msra.mxu0 0
    %1139 = vmatprep.subr.bf16.mxu0 0
    %1140 = vmatpush1.bf16.msra.mxu0 0
    %1141 = vmatprep.subr.bf16.mxu0 0
    %1142 = vmatpush1.bf16.msra.mxu0 0
    %1143 = vmatprep.subr.bf16.mxu0 0
    %1144 = vmatpush1.bf16.msra.mxu0 0
    %1145 = vmatprep.subr.bf16.mxu0 0
    %1146 = vmatpush1.bf16.msra.mxu0 0
    %1147 = vmatprep.subr.bf16.mxu0 0
    %1148 = vmatpush1.bf16.msra.mxu0 0
    %1149 = vmatprep.subr.bf16.mxu0 0
    %1150 = vmatpush1.bf16.msra.mxu0 0
    %1151 = vmatprep.subr.bf16.mxu0 0
    %1152 = vmatpush1.bf16.msra.mxu0 0
    %1153 = vmatprep.subr.bf16.mxu0 0
    %1154 = vmatpush1.bf16.msra.mxu0 0
    %1155 = vmatprep.subr.bf16.mxu0 0
    %1156 = vmatpush1.bf16.msra.mxu0 0
    %1157 = vmatprep.subr.bf16.mxu0 0
    %1158 = vmatpush1.bf16.msra.mxu0 0
    %1159 = vmatprep.subr.bf16.mxu0 0
    %1160 = vmatpush1.bf16.msra.mxu0 0
    %1161 = vmatprep.mubr.bf16.mxu0 0
    %1162 = vmatmul.mubr.bf16.gmra.mrb[0].mxu0 %v1124
    %v1163 = vpop.f32.mrb[0].mxu0
    %v1164 = vadd.f32 0.0, %v1163
    %v1165 = vpop.f32.mrb[0].mxu0
    %v1166 = vpop.f32.mrb[0].mxu0
    %v1167 = vpop.f32.mrb[0].mxu0
    %1168 = vdwg.mxu0
    %1171 = vrot.lane.b32.xlu0 %v934, 16
    %v1172 = vpop.permute.xlu0 %1171
    %1173 = vrot.lane.b32.xlu0 %v980, 16
    %v1174 = vpop.permute.xlu0 %1173
    %1179 = vrot.lane.b32.xlu0 %v1026, 32
    %v1180 = vpop.permute.xlu0 %1179
    %1181 = vrot.lane.b32.xlu0 %v1072, 32
    %v1182 = vpop.permute.xlu0 %1181
    %1187 = vrot.lane.b32.xlu0 %v1118, 48
    %v1188 = vpop.permute.xlu0 %1187
    %1189 = vrot.lane.b32.xlu0 %v1164, 48
    %v1190 = vpop.permute.xlu0 %1189
    %v1193 = vsel %vm313, %v842, %v1172
    %v1194 = vsel %vm313, %v888, %v1174
    %vm1195 = vcmask 261120
    %v1196 = vsel %vm1195, %v1193, %v1180
    %v1197 = vsel %vm1195, %v1194, %v1182
    %vm1198 = vcmask 392192
    %v1199 = vsel %vm1198, %v1196, %v1188
    %v1200 = vsel %vm1198, %v1197, %v1190
    %v1201 = vpack.c.bf16 %v1200, %v1199
    %v1202 = vld [vmem:[#allocation7] sm:$0xf]
    %v1203 = vld [vmem:[#allocation7 + $0x4] sm:$0xf]
    %v1204 = vld [vmem:[#allocation7 + $0x8] sm:$0xf]
    %v1205 = vld [vmem:[#allocation7 + $0xc] sm:$0xf]
    %v1206 = vld [vmem:[#allocation7 + $0x10] sm:$0xf]
    %v1207 = vld [vmem:[#allocation7 + $0x14] sm:$0xf]
    %v1208 = vld [vmem:[#allocation7 + $0x18] sm:$0xf]
    %v1209 = vld [vmem:[#allocation7 + $0x1c] sm:$0xf]
    %v1210 = vld [vmem:[%s4] sm:$0x1]
    %v1212 = vlaneseq
    %v1213 = vshrl.u32 %v1212, 7
    %v1214 = vsub.s32 0, %v1213
    %v1215 = vrot.slane %v1210, %v1214
    %v1225 = vunpack.c.l.b16 %v1202
    %v1226 = vunpack.c.l.b16 %v1203
    %v1227 = vunpack.c.l.b16 %v1204
    %v1228 = vunpack.c.l.b16 %v1205
    %v1229 = vunpack.c.l.b16 %v1206
    %v1230 = vunpack.c.l.b16 %v1207
    %v1231 = vunpack.c.l.b16 %v1208
    %v1232 = vunpack.c.l.b16 %v1209
    %v1233 = vpack.c.b16 %v1226, %v1225
    %v1234 = vpack.c.b16 %v1228, %v1227
    %v1235 = vpack.c.b16 %v1230, %v1229
    %v1236 = vpack.c.b16 %v1232, %v1231
    %v1242 = vsel %vm177, %v1201, 0
    %1244 = vmatprep.subr.bf16.mxu0 0
    %1245 = vmatpush1.bf16.msra.mxu0 %v1233
    %1246 = vmatprep.subr.bf16.mxu0 0
    %1247 = vmatpush1.bf16.msra.mxu0 %v1234
    %1248 = vmatprep.subr.bf16.mxu0 0
    %1249 = vmatpush1.bf16.msra.mxu0 %v1235
    %1250 = vmatprep.subr.bf16.mxu0 0
    %1251 = vmatpush1.bf16.msra.mxu0 %v1236
    %1252 = vmatprep.subr.bf16.mxu0 0
    %1253 = vmatpush1.bf16.msra.mxu0 0
    %1254 = vmatprep.subr.bf16.mxu0 0
    %1255 = vmatpush1.bf16.msra.mxu0 0
    %1256 = vmatprep.subr.bf16.mxu0 0
    %1257 = vmatpush1.bf16.msra.mxu0 0
    %1258 = vmatprep.subr.bf16.mxu0 0
    %1259 = vmatpush1.bf16.msra.mxu0 0
    %1260 = vmatprep.subr.bf16.mxu0 0
    %1261 = vmatpush1.bf16.msra.mxu0 0
    %1262 = vmatprep.subr.bf16.mxu0 0
    %1263 = vmatpush1.bf16.msra.mxu0 0
    %1264 = vmatprep.subr.bf16.mxu0 0
    %1265 = vmatpush1.bf16.msra.mxu0 0
    %1266 = vmatprep.subr.bf16.mxu0 0
    %1267 = vmatpush1.bf16.msra.mxu0 0
    %1268 = vmatprep.subr.bf16.mxu0 0
    %1269 = vmatpush1.bf16.msra.mxu0 0
    %1270 = vmatprep.subr.bf16.mxu0 0
    %1271 = vmatpush1.bf16.msra.mxu0 0
    %1272 = vmatprep.subr.bf16.mxu0 0
    %1273 = vmatpush1.bf16.msra.mxu0 0
    %1274 = vmatprep.subr.bf16.mxu0 0
    %1275 = vmatpush1.bf16.msra.mxu0 0
    %1276 = vmatprep.mubr.bf16.mxu0 0
    %1277 = vmatmul.mubr.bf16.gmra.mrb[0].mxu0 %v1242
    %v1278 = vpop.f32.mrb[0].mxu0
    %v1279 = vadd.f32 %v1215, %v1278
    %v1280 = vpop.f32.mrb[0].mxu0
    %v1281 = vpop.f32.mrb[0].mxu0
    %v1282 = vadd.f32 %v1215, %v1281
    %v1283 = vpop.f32.mrb[0].mxu0
    %1284 = vdwg.mxu0
    %v1285 = vadd.f32 %v114, %v1279
    %v1286 = vadd.f32 %v115, %v1282
    %v1287 = vpack.c.bf16 %v1286, %v1285
    %v1288 = vld [vmem:[#allocation8] sm:$0xf]
    %v1289 = vld [vmem:[#allocation8 + $0x4] sm:$0xf]
    %v1290 = vld [vmem:[#allocation8 + $0x8] sm:$0xf]
    %v1291 = vld [vmem:[#allocation8 + $0xc] sm:$0xf]
    %v1292 = vld [vmem:[#allocation8 + $0x10] sm:$0xf]
    %v1293 = vld [vmem:[#allocation8 + $0x14] sm:$0xf]
    %v1294 = vld [vmem:[#allocation8 + $0x18] sm:$0xf]
    %v1295 = vld [vmem:[#allocation8 + $0x1c] sm:$0xf]
    %v1296 = vld [vmem:[%s6] sm:$0x1]
    %v1298 = vlaneseq
    %v1299 = vshrl.u32 %v1298, 7
    %v1300 = vsub.s32 0, %v1299
    %v1301 = vrot.slane %v1296, %v1300
    %v1311 = vunpack.c.l.b16 %v1288
    %v1312 = vunpack.c.l.b16 %v1289
    %v1313 = vunpack.c.l.b16 %v1290
    %v1314 = vunpack.c.l.b16 %v1291
    %v1315 = vunpack.c.l.b16 %v1292
    %v1316 = vunpack.c.l.b16 %v1293
    %v1317 = vunpack.c.l.b16 %v1294
    %v1318 = vunpack.c.l.b16 %v1295
    %v1319 = vpack.c.b16 %v1312, %v1311
    %v1320 = vpack.c.b16 %v1314, %v1313
    %v1321 = vpack.c.b16 %v1316, %v1315
    %v1322 = vpack.c.b16 %v1318, %v1317
    %v1328 = vsel %vm177, %v1287, 0
    %1330 = vmatprep.subr.bf16.mxu0 0
    %1331 = vmatpush1.bf16.msra.mxu0 %v1319
    %1332 = vmatprep.subr.bf16.mxu0 0
    %1333 = vmatpush1.bf16.msra.mxu0 %v1320
    %1334 = vmatprep.subr.bf16.mxu0 0
    %1335 = vmatpush1.bf16.msra.mxu0 %v1321
    %1336 = vmatprep.subr.bf16.mxu0 0
    %1337 = vmatpush1.bf16.msra.mxu0 %v1322
    %1338 = vmatprep.subr.bf16.mxu0 0
    %1339 = vmatpush1.bf16.msra.mxu0 0
    %1340 = vmatprep.subr.bf16.mxu0 0
    %1341 = vmatpush1.bf16.msra.mxu0 0
    %1342 = vmatprep.subr.bf16.mxu0 0
    %1343 = vmatpush1.bf16.msra.mxu0 0
    %1344 = vmatprep.subr.bf16.mxu0 0
    %1345 = vmatpush1.bf16.msra.mxu0 0
    %1346 = vmatprep.subr.bf16.mxu0 0
    %1347 = vmatpush1.bf16.msra.mxu0 0
    %1348 = vmatprep.subr.bf16.mxu0 0
    %1349 = vmatpush1.bf16.msra.mxu0 0
    %1350 = vmatprep.subr.bf16.mxu0 0
    %1351 = vmatpush1.bf16.msra.mxu0 0
    %1352 = vmatprep.subr.bf16.mxu0 0
    %1353 = vmatpush1.bf16.msra.mxu0 0
    %1354 = vmatprep.subr.bf16.mxu0 0
    %1355 = vmatpush1.bf16.msra.mxu0 0
    %1356 = vmatprep.subr.bf16.mxu0 0
    %1357 = vmatpush1.bf16.msra.mxu0 0
    %1358 = vmatprep.subr.bf16.mxu0 0
    %1359 = vmatpush1.bf16.msra.mxu0 0
    %1360 = vmatprep.subr.bf16.mxu0 0
    %1361 = vmatpush1.bf16.msra.mxu0 0
    %1362 = vmatprep.mubr.bf16.mxu0 0
    %1363 = vmatmul.mubr.bf16.gmra.mrb[0].mxu0 %v1328
    %v1364 = vpop.f32.mrb[0].mxu0
    %v1365 = vadd.f32 %v1301, %v1364
    %v1366 = vpop.f32.mrb[0].mxu0
    %v1367 = vpop.f32.mrb[0].mxu0
    %v1368 = vadd.f32 %v1301, %v1367
    %v1369 = vpop.f32.mrb[0].mxu0
    %1370 = vdwg.mxu0
    %v1371 = vmax.f32 %v1365, 0.0
    %v1372 = vmax.f32 %v1368, 0.0
    %v1373 = vpack.c.bf16 %v1372, %v1371
    %v1374 = vld [vmem:[#allocation10] sm:$0xf]
    %v1375 = vld [vmem:[#allocation10 + $0x4] sm:$0xf]
    %v1376 = vld [vmem:[#allocation10 + $0x8] sm:$0xf]
    %v1377 = vld [vmem:[#allocation10 + $0xc] sm:$0xf]
    %v1378 = vld [vmem:[#allocation10 + $0x10] sm:$0xf]
    %v1379 = vld [vmem:[#allocation10 + $0x14] sm:$0xf]
    %v1380 = vld [vmem:[#allocation10 + $0x18] sm:$0xf]
    %v1381 = vld [vmem:[#allocation10 + $0x1c] sm:$0xf]
    %v1382 = vld [vmem:[%s8] sm:$0x1]
    %v1384 = vlaneseq
    %v1385 = vshrl.u32 %v1384, 7
    %v1386 = vsub.s32 0, %v1385
    %v1387 = vrot.slane %v1382, %v1386
    %v1397 = vunpack.c.l.b16 %v1374
    %v1398 = vunpack.c.l.b16 %v1375
    %v1399 = vunpack.c.l.b16 %v1376
    %v1400 = vunpack.c.l.b16 %v1377
    %v1401 = vunpack.c.l.b16 %v1378
    %v1402 = vunpack.c.l.b16 %v1379
    %v1403 = vunpack.c.l.b16 %v1380
    %v1404 = vunpack.c.l.b16 %v1381
    %v1405 = vpack.c.b16 %v1398, %v1397
    %v1406 = vpack.c.b16 %v1400, %v1399
    %v1407 = vpack.c.b16 %v1402, %v1401
    %v1408 = vpack.c.b16 %v1404, %v1403
    %v1414 = vsel %vm177, %v1373, 0
    %1416 = vmatprep.subr.bf16.mxu0 0
    %1417 = vmatpush1.bf16.msra.mxu0 %v1405
    %1418 = vmatprep.subr.bf16.mxu0 0
    %1419 = vmatpush1.bf16.msra.mxu0 %v1406
    %1420 = vmatprep.subr.bf16.mxu0 0
    %1421 = vmatpush1.bf16.msra.mxu0 %v1407
    %1422 = vmatprep.subr.bf16.mxu0 0
    %1423 = vmatpush1.bf16.msra.mxu0 %v1408
    %1424 = vmatprep.subr.bf16.mxu0 0
    %1425 = vmatpush1.bf16.msra.mxu0 0
    %1426 = vmatprep.subr.bf16.mxu0 0
    %1427 = vmatpush1.bf16.msra.mxu0 0
    %1428 = vmatprep.subr.bf16.mxu0 0
    %1429 = vmatpush1.bf16.msra.mxu0 0
    %1430 = vmatprep.subr.bf16.mxu0 0
    %1431 = vmatpush1.bf16.msra.mxu0 0
    %1432 = vmatprep.subr.bf16.mxu0 0
    %1433 = vmatpush1.bf16.msra.mxu0 0
    %1434 = vmatprep.subr.bf16.mxu0 0
    %1435 = vmatpush1.bf16.msra.mxu0 0
    %1436 = vmatprep.subr.bf16.mxu0 0
    %1437 = vmatpush1.bf16.msra.mxu0 0
    %1438 = vmatprep.subr.bf16.mxu0 0
    %1439 = vmatpush1.bf16.msra.mxu0 0
    %1440 = vmatprep.subr.bf16.mxu0 0
    %1441 = vmatpush1.bf16.msra.mxu0 0
    %1442 = vmatprep.subr.bf16.mxu0 0
    %1443 = vmatpush1.bf16.msra.mxu0 0
    %1444 = vmatprep.subr.bf16.mxu0 0
    %1445 = vmatpush1.bf16.msra.mxu0 0
    %1446 = vmatprep.subr.bf16.mxu0 0
    %1447 = vmatpush1.bf16.msra.mxu0 0
    %1448 = vmatprep.mubr.bf16.mxu0 0
    %1449 = vmatmul.mubr.bf16.gmra.mrb[0].mxu0 %v1414
    %v1450 = vpop.f32.mrb[0].mxu0
    %v1451 = vadd.f32 %v1387, %v1450
    %v1452 = vpop.f32.mrb[0].mxu0
    %v1453 = vpop.f32.mrb[0].mxu0
    %v1454 = vadd.f32 %v1387, %v1453
    %v1455 = vpop.f32.mrb[0].mxu0
    %1456 = vdwg.mxu0
    %v1457 = vadd.f32 %v1285, %v1451
    %v1458 = vadd.f32 %v1286, %v1454
    %v1459 = vld [vmem:[%s9] sm:$0x1]
    %v1460 = vld [vmem:[%s10] sm:$0x1]
    %v1461 = vsel %vm177, %v1457, 0.0
    %1462 = vadd.xlane.f32.xlu0 %v1461
    %v1463 = vpop.xlane.xlu0 %1462
    %v1464 = vsel %vm177, %v1458, 0.0
    %1465 = vadd.xlane.f32.xlu0 %v1464
    %v1466 = vpop.xlane.xlu0 %1465
    %v1467 = vrcp.pop 64.0
    %v1468 = vmul.f32 %v1463, %v1467
    %v1469 = vmul.f32 %v1466, %v1467
    %v1470 = vsub.f32 %v1457, %v1468
    %v1471 = vsub.f32 %v1458, %v1469
    %v1472 = vmul.f32 %v1470, %v1470
    %v1473 = vmul.f32 %v1471, %v1471
    %v1474 = vsel %vm177, %v1472, 0.0
    %1475 = vadd.xlane.f32.xlu0 %v1474
    %v1476 = vpop.xlane.xlu0 %1475
    %v1477 = vsel %vm177, %v1473, 0.0
    %1478 = vadd.xlane.f32.xlu0 %v1477
    %v1479 = vpop.xlane.xlu0 %1478
    %v1480 = vmul.f32 %v1476, %v1467
    %v1481 = vmul.f32 %v1479, %v1467
    %v1482 = vadd.f32 %v1480, 1e-05
    %v1483 = vadd.f32 %v1481, 1e-05
    %v1484 = vrsqrt.pop %v1482
    %v1485 = vrsqrt.pop %v1483
    %v1486 = vmul.f32 %v1470, %v1484
    %v1487 = vmul.f32 %v1471, %v1485
    %v1489 = vlaneseq
    %v1490 = vshrl.u32 %v1489, 7
    %v1491 = vsub.s32 0, %v1490
    %v1492 = vrot.slane %v1459, %v1491
    %v1494 = vmul.f32 %v1486, %v1492
    %v1495 = vmul.f32 %v1487, %v1492
    %v1497 = vlaneseq
    %v1498 = vshrl.u32 %v1497, 7
    %v1499 = vsub.s32 0, %v1498
    %v1500 = vrot.slane %v1460, %v1499
    %v1502 = vadd.f32 %v1494, %v1500
    %v1503 = vadd.f32 %v1495, %v1500
    %v1504 = vld [vmem:[%s11] sm:$0x1]
    %v1505 = vld [vmem:[%s12] sm:$0x1]
    %v1506 = vsel %vm177, %v1502, 0.0
    %1507 = vadd.xlane.f32.xlu0 %v1506
    %v1508 = vpop.xlane.xlu0 %1507
    %v1509 = vsel %vm177, %v1503, 0.0
    %1510 = vadd.xlane.f32.xlu0 %v1509
    %v1511 = vpop.xlane.xlu0 %1510
    %v1512 = vmul.f32 %v1508, %v1467
    %v1513 = vmul.f32 %v1511, %v1467
    %v1514 = vsub.f32 %v1502, %v1512
    %v1515 = vsub.f32 %v1503, %v1513
    %v1516 = vmul.f32 %v1514, %v1514
    %v1517 = vmul.f32 %v1515, %v1515
    %v1518 = vsel %vm177, %v1516, 0.0
    %1519 = vadd.xlane.f32.xlu0 %v1518
    %v1520 = vpop.xlane.xlu0 %1519
    %v1521 = vsel %vm177, %v1517, 0.0
    %1522 = vadd.xlane.f32.xlu0 %v1521
    %v1523 = vpop.xlane.xlu0 %1522
    %v1524 = vmul.f32 %v1520, %v1467
    %v1525 = vmul.f32 %v1523, %v1467
    %v1526 = vadd.f32 %v1524, 1e-05
    %v1527 = vadd.f32 %v1525, 1e-05
    %v1528 = vrsqrt.pop %v1526
    %v1529 = vrsqrt.pop %v1527
    %v1530 = vmul.f32 %v1514, %v1528
    %v1531 = vmul.f32 %v1515, %v1529
    %v1533 = vlaneseq
    %v1534 = vshrl.u32 %v1533, 7
    %v1535 = vsub.s32 0, %v1534
    %v1536 = vrot.slane %v1504, %v1535
    %v1538 = vmul.f32 %v1530, %v1536
    %v1539 = vmul.f32 %v1531, %v1536
    %v1541 = vlaneseq
    %v1542 = vshrl.u32 %v1541, 7
    %v1543 = vsub.s32 0, %v1542
    %v1544 = vrot.slane %v1505, %v1543
    %v1546 = vadd.f32 %v1538, %v1544
    %v1547 = vadd.f32 %v1539, %v1544
    %1548 = vst.msk [vmem:[#allocation11] sm:$0xff] %vm177, %v1546
    %1549 = vst.msk [vmem:[#allocation11 + $0x8] sm:$0xff] %vm177, %v1547
    // Predicated region
    $region74: #{tpu_custom_call.1} parent=1 // pred_check
      _
    $region75: #{tpu_custom_call.1} parent=1 // pred_check_branch
      %1551 = sbr.rel (0) target = $region77
    $region76: #{tpu_custom_call.1} parent=1 // pred_region
      %s1553 = ssub.s32 256, 256
      %1554 = vsyncadd [#allocation4], %s1553
      %s1555 = sshll.u32 [#allocation11], 4
      %s1556 = int_to_ptr.vmem [resolvable:$true] %s1555
      %1561 = dma.vmem_to_hbm [thread:$0]  %s1556, 256, %s13, [#allocation4], 128, 128, 8
    $region77: #{tpu_custom_call.1} parent=1 // pred_fallthru
      _
    // Predicated region
    $region78: #{tpu_custom_call.1} parent=1 // pred_check
      _
    $region79: #{tpu_custom_call.1} parent=1 // pred_check_branch
      %1563 = sbr.rel (0) target = $region81
    $region80: #{tpu_custom_call.1} parent=1 // pred_region
      %1564 = dma.done [#allocation4], 256
    $region81: #{tpu_custom_call.1} parent=1 // pred_fallthru
      _
    %1565 = vsyncpa [#allocation3], 1
    %1566 = vsyncpa [#allocation6], 1
    %1567 = vsyncpa [#allocation9], 1
    %1568 = vsyncpa [#allocation4], 1

</llo_original>
